<compile_context>
chip_gen: v7x
topology: tpu7x:2x2x1
jax: 0.10.0
libtpu: 0.0.40
codegen_flags: <defaults>
</compile_context>

<pallas_src>
import jax
import jax.numpy as jnp
from jax import lax
from jax.experimental import pallas as pl
from jax.experimental.pallas import tpu as pltpu


def icl_exact_kernel(q_ref, k_ref, v_ref, w_ref, wr_ref, cos_ref, sins_ref,
                     nsc_ref, rot_ref, lr_ref, out_ref):
    S, E = q_ref.shape
    H = w_ref.shape[0]
    half = E // 2

    q = q_ref[...]                      # (S, E)
    k = k_ref[...]
    v = v_ref[...]
    cos = cos_ref[...]                  # (S, E)
    sins = sins_ref[...]                # (S, E) sign-folded sin: [-sin | sin]

    # Swap-halves of q and k, computed ONCE per batch (shared by all heads).
    if E % 128 == 0:
        # Lane-aligned feature dim: XLU roll (free slot), no MXU push, no rot DMA use.
        q_rot = pltpu.roll(q, shift=half, axis=-1)
        k_rot = pltpu.roll(k, shift=half, axis=-1)
    else:
        # E < 128 lanes: use the constant unsigned swap-halves matrix on the
        # otherwise-idle MXU (Mosaic lane rotate needs a 128-multiple minor dim).
        rot = rot_ref[...]              # (E, E), x @ rot == concat([x2, x1])
        q_rot = jnp.dot(q, rot, preferred_element_type=jnp.float32)
        k_rot = jnp.dot(k, rot, preferred_element_type=jnp.float32)

    qc, qs = q * cos, q_rot * sins      # (S, E) each
    kc, ks = k * cos, k_rot * sins

    # (S, S) index grids, built once (not per head).
    row = lax.broadcasted_iota(jnp.int32, (S, S), 0)    # query index
    col = lax.broadcasted_iota(jnp.int32, (S, S), 1)    # key index
    causal = col > row

    def head_body(h, p_c):
        w_h = w_ref[pl.ds(h, 1), :]     # (1, E)  diag(W_qk) for head h
        wr_h = wr_ref[pl.ds(h, 1), :]   # (1, E)  swap-halves of w_h
        # rope(q * diag(w_h)) = (q*cos)*w_h + (swap(q)*sin_signed)*swap(w_h)
        qh = qc * w_h + qs * wr_h       # (S, E)
        kh = kc * w_h + ks * wr_h
        scores = lax.dot_general(       # (S, S), rhs transposed on the MXU
            qh, kh, dimension_numbers=(((1,), (1,)), ((), ())),
            preferred_element_type=jnp.float32)
        scores = jnp.where(causal, jnp.float32(-1e30), scores)
        m = jnp.max(scores, axis=-1, keepdims=True)
        p_exp = jnp.exp(scores - m)
        denom = jnp.sum(p_exp, axis=-1, keepdims=True)
        p = p_exp * pl.reciprocal(denom, approx=False)   # exact; runs on EUP
        return p_c + lr_ref[h] * p      # lr_h is a scalar read from SMEM

    p_c = lax.fori_loop(0, H, head_body,
                        jnp.zeros((S, S), jnp.float32), unroll=True)

    # Diagonal zeroing commutes with the lr-weighted head sum: one (S,S) select.
    p_c = jnp.where(row == col, jnp.float32(0.0), p_c)

    # out[s, d] = sum_z p_c[z, s] * v[z, d]: contract the query axis directly,
    # no materialized transpose of p_c.
    attn = lax.dot_general(p_c, v,
                           dimension_numbers=(((0,), (0,)), ((), ())),
                           preferred_element_type=jnp.float32)   # (S, E)

    out_ref[...] = attn * nsc_ref[...]                  # * N_scaling (S, 1)


def icl_attention_exact_forward(q, k, v, W_qk_diag, lr_values):
    """ICLAttentionExact.forward (eval mode). q, k, v: (B, S, E) float32."""
    B, S, E = q.shape
    H = W_qk_diag.shape[0]
    half = E // 2

    # RoPE tables (rotate-half convention), shape (S, E).  The rotation sign is
    # folded into the sin table: rotate_half(x)*sin == swap_halves(x)*sin_signed.
    inv_freq = 1.0 / (10000.0 ** (jnp.arange(half, dtype=jnp.float32) / half))
    ang = jnp.arange(S, dtype=jnp.float32)[:, None] * inv_freq[None, :]
    cos = jnp.concatenate([jnp.cos(ang), jnp.cos(ang)], axis=-1)
    sin_signed = jnp.concatenate([-jnp.sin(ang), jnp.sin(ang)], axis=-1)

    # Constant unsigned swap-halves matrix: x @ rot == concat([x2, x1]).
    # Only consumed on the E % 128 != 0 fallback path inside the kernel.
    idx = jnp.arange(half)
    rot = jnp.zeros((E, E), jnp.float32)
    rot = rot.at[idx + half, idx].set(1.0)
    rot = rot.at[idx, idx + half].set(1.0)

    w = W_qk_diag.astype(jnp.float32)                        # (H, E)
    wr = jnp.roll(w, shift=half, axis=-1)                    # swap-halves weights
    lr = lr_values.astype(jnp.float32)                       # (H,) -> SMEM scalars
    nsc = (1.0 / jnp.arange(1, S + 1, dtype=jnp.float32)).reshape(S, 1)

    return pl.pallas_call(
        icl_exact_kernel,
        out_shape=jax.ShapeDtypeStruct((B, S, E), jnp.float32),
        grid=(B,),
        in_specs=[
            pl.BlockSpec((pl.Squeezed(), S, E), lambda b: (b, 0, 0)),  # q
            pl.BlockSpec((pl.Squeezed(), S, E), lambda b: (b, 0, 0)),  # k
            pl.BlockSpec((pl.Squeezed(), S, E), lambda b: (b, 0, 0)),  # v
            pl.BlockSpec((H, E), lambda b: (0, 0)),                    # W_qk_diag
            pl.BlockSpec((H, E), lambda b: (0, 0)),                    # swapped W_qk_diag
            pl.BlockSpec((S, E), lambda b: (0, 0)),                    # cos
            pl.BlockSpec((S, E), lambda b: (0, 0)),                    # sin (sign-folded)
            pl.BlockSpec((S, 1), lambda b: (0, 0)),                    # N_scaling
            pl.BlockSpec((E, E), lambda b: (0, 0)),                    # swap-halves matrix
            pl.BlockSpec(memory_space=pltpu.MemorySpace.SMEM),         # lr_values (H,)
        ],
        out_specs=pl.BlockSpec((pl.Squeezed(), S, E), lambda b: (b, 0, 0)),
        compiler_params=pltpu.CompilerParams(
            dimension_semantics=("parallel",),
            vmem_limit_bytes=48 * 1024 * 1024),
    )(q, k, v, w, wr, cos, sin_signed, nsc, rot, lr)


def icl_attention_exact_reference(q, k, v, W_qk_diag, lr_values):
    """Pure-JAX reference mirroring the PyTorch ICLAttentionExact (eval mode)."""
    B, S, E = q.shape
    H = W_qk_diag.shape[0]
    half = E // 2

    qh = q[:, None, :, :] * W_qk_diag[None, :, None, :]   # diag_embed einsum
    kh = k[:, None, :, :] * W_qk_diag[None, :, None, :]
    vh = jnp.broadcast_to(v[:, None], (B, H, S, E))

    inv_freq = 1.0 / (10000.0 ** (jnp.arange(half, dtype=jnp.float32) / half))
    ang = jnp.arange(S, dtype=jnp.float32)[:, None] * inv_freq[None, :]
    cos = jnp.concatenate([jnp.cos(ang), jnp.cos(ang)], axis=-1)
    sin = jnp.concatenate([jnp.sin(ang), jnp.sin(ang)], axis=-1)

    def rope(x):
        x1, x2 = x[..., :half], x[..., half:]
        return x * cos + jnp.concatenate([-x2, x1], axis=-1) * sin

    qh, kh = rope(qh), rope(kh)

    scores = jnp.einsum('bhqd,bhkd->bhqk', qh, kh)
    causal = jnp.triu(jnp.ones((S, S), dtype=bool), 1)
    scores = jnp.where(causal, -jnp.inf, scores)
    p = jax.nn.softmax(scores, axis=-1)
    p = p * (1.0 - jnp.eye(S, dtype=jnp.float32))
    attn = jnp.einsum('bhzs,bhzd->bhsd', p, vh)
    attn = attn * lr_values.reshape(1, H, 1, 1)
    attn = attn.sum(axis=1)
    nsc = (1.0 / jnp.arange(1, S + 1, dtype=jnp.float32)).reshape(1, S, 1)
    return attn * nsc


if __name__ == "__main__":
    # Config: n_heads=4, d_embed=32, max_seq_len>=8.
    B, S, E, H = 2, 8, 32, 4

    key = jax.random.PRNGKey(0)
    kq, kk, kv, kw, kl = jax.random.split(key, 5)
    q = jax.random.normal(kq, (B, S, E), dtype=jnp.float32)
    k = jax.random.normal(kk, (B, S, E), dtype=jnp.float32)
    v = jax.random.normal(kv, (B, S, E), dtype=jnp.float32)
    # Parameters are zero-initialized in the PyTorch module; use deterministic
    # small random values so the kernel computes something non-trivial.
    W_qk_diag = 0.5 * jax.random.normal(kw, (H, E), dtype=jnp.float32)
    lr_values = 0.1 * jax.random.normal(kl, (H,), dtype=jnp.float32)

    out = icl_attention_exact_forward(q, k, v, W_qk_diag, lr_values)
    jax.block_until_ready(out)

    ref = icl_attention_exact_reference(q, k, v, W_qk_diag, lr_values)
    max_err = jnp.max(jnp.abs(out - ref))
    assert out.shape == (B, S, E)
    # Residual tolerance covers the reference's default-precision XLA einsums.
    assert jnp.allclose(out, ref, atol=2e-3, rtol=2e-3), \
        f"mismatch vs reference: max abs err {max_err}"

    print("KERNEL_OK")
</pallas_src>

<mosaic_0001>
module attributes {stable_mosaic.version = 11 : i64} {
  func.func @icl_exact_kernel(%arg0: i32, %arg1: memref<1x8x32xf32, #tpu.memory_space<vmem>>, %arg2: memref<1x8x32xf32, #tpu.memory_space<vmem>>, %arg3: memref<1x8x32xf32, #tpu.memory_space<vmem>>, %arg4: memref<4x32xf32, #tpu.memory_space<vmem>>, %arg5: memref<4x32xf32, #tpu.memory_space<vmem>>, %arg6: memref<8x32xf32, #tpu.memory_space<vmem>>, %arg7: memref<8x32xf32, #tpu.memory_space<vmem>>, %arg8: memref<8x1xf32, #tpu.memory_space<vmem>>, %arg9: memref<32x32xf32, #tpu.memory_space<vmem>>, %arg10: memref<4xf32, #tpu.memory_space<smem>>, %arg11: memref<1x8x32xf32, #tpu.memory_space<vmem>>) attributes {dimension_semantics = [#tpu.dimension_semantics<parallel>], iteration_bounds = array<i64: 2>, scalar_prefetch = 0 : i64, scratch_operands = 0 : i64, tpu.core_type = #tpu.core_type<tc>, window_params = [{transform_indices = @transform_0, window_bounds = array<i64: 1, 8, 32>}, {transform_indices = @transform_1, window_bounds = array<i64: 1, 8, 32>}, {transform_indices = @transform_2, window_bounds = array<i64: 1, 8, 32>}, {pipeline_mode = #tpu.pipeline_mode<synchronous>, transform_indices = @transform_3, window_bounds = array<i64: 4, 32>}, {pipeline_mode = #tpu.pipeline_mode<synchronous>, transform_indices = @transform_4, window_bounds = array<i64: 4, 32>}, {pipeline_mode = #tpu.pipeline_mode<synchronous>, transform_indices = @transform_5, window_bounds = array<i64: 8, 32>}, {pipeline_mode = #tpu.pipeline_mode<synchronous>, transform_indices = @transform_6, window_bounds = array<i64: 8, 32>}, {pipeline_mode = #tpu.pipeline_mode<synchronous>, transform_indices = @transform_7, window_bounds = array<i64: 8, 1>}, {pipeline_mode = #tpu.pipeline_mode<synchronous>, transform_indices = @transform_8, window_bounds = array<i64: 32, 32>}, {transform_indices = @transform_9, window_bounds = array<i64: 4>}, {transform_indices = @transform_10, window_bounds = array<i64: 1, 8, 32>}]} {
    %c0 = arith.constant 0 : index
    %c0_0 = arith.constant 0 : index
    %c0_1 = arith.constant 0 : index
    %0 = vector.load %arg1[%c0, %c0_0, %c0_1] : memref<1x8x32xf32, #tpu.memory_space<vmem>>, vector<1x8x32xf32>
    %1 = vector.shape_cast %0 : vector<1x8x32xf32> to vector<8x32xf32>
    %c0_2 = arith.constant 0 : index
    %c0_3 = arith.constant 0 : index
    %c0_4 = arith.constant 0 : index
    %2 = vector.load %arg2[%c0_2, %c0_3, %c0_4] : memref<1x8x32xf32, #tpu.memory_space<vmem>>, vector<1x8x32xf32>
    %3 = vector.shape_cast %2 : vector<1x8x32xf32> to vector<8x32xf32>
    %c0_5 = arith.constant 0 : index
    %c0_6 = arith.constant 0 : index
    %c0_7 = arith.constant 0 : index
    %4 = vector.load %arg3[%c0_5, %c0_6, %c0_7] : memref<1x8x32xf32, #tpu.memory_space<vmem>>, vector<1x8x32xf32>
    %5 = vector.shape_cast %4 : vector<1x8x32xf32> to vector<8x32xf32>
    %c0_8 = arith.constant 0 : index
    %c0_9 = arith.constant 0 : index
    %6 = vector.load %arg6[%c0_8, %c0_9] : memref<8x32xf32, #tpu.memory_space<vmem>>, vector<8x32xf32>
    %c0_10 = arith.constant 0 : index
    %c0_11 = arith.constant 0 : index
    %7 = vector.load %arg7[%c0_10, %c0_11] : memref<8x32xf32, #tpu.memory_space<vmem>>, vector<8x32xf32>
    %c0_12 = arith.constant 0 : index
    %c0_13 = arith.constant 0 : index
    %8 = vector.load %arg9[%c0_12, %c0_13] : memref<32x32xf32, #tpu.memory_space<vmem>>, vector<32x32xf32>
    %cst = arith.constant dense<0.000000e+00> : vector<8x32xf32>
    %9 = tpu.matmul %1, %8, %cst {dimension_numbers = #tpu.dot_dimension_numbers<[1], [0], [0], [1], [0, 0, 1, 1], [], []>} : vector<8x32xf32>, vector<32x32xf32>, vector<8x32xf32> -> vector<8x32xf32>
    %cst_14 = arith.constant dense<0.000000e+00> : vector<8x32xf32>
    %10 = tpu.matmul %3, %8, %cst_14 {dimension_numbers = #tpu.dot_dimension_numbers<[1], [0], [0], [1], [0, 0, 1, 1], [], []>} : vector<8x32xf32>, vector<32x32xf32>, vector<8x32xf32> -> vector<8x32xf32>
    %11 = arith.mulf %1, %6 : vector<8x32xf32>
    %12 = arith.mulf %9, %7 : vector<8x32xf32>
    %13 = arith.mulf %3, %6 : vector<8x32xf32>
    %14 = arith.mulf %10, %7 : vector<8x32xf32>
    %15 = tpu.iota {dimensions = array<i32: 0>} : vector<8x8xi32>
    %16 = tpu.iota {dimensions = array<i32: 1>} : vector<8x8xi32>
    %17 = arith.cmpi sgt, %16, %15 : vector<8x8xi32>
    %cst_15 = arith.constant 0.000000e+00 : f32
    %18 = vector.broadcast %cst_15 : f32 to vector<8x8xf32>
    %c0_i32 = arith.constant 0 : i32
    %19 = arith.index_cast %c0_i32 : i32 to index
    %c0_16 = arith.constant 0 : index
    %20 = vector.load %arg4[%19, %c0_16] : memref<4x32xf32, #tpu.memory_space<vmem>>, vector<1x32xf32>
    %21 = arith.index_cast %c0_i32 : i32 to index
    %c0_17 = arith.constant 0 : index
    %22 = vector.load %arg5[%21, %c0_17] : memref<4x32xf32, #tpu.memory_space<vmem>>, vector<1x32xf32>
    %23 = vector.broadcast %20 : vector<1x32xf32> to vector<8x32xf32>
    %24 = arith.mulf %11, %23 : vector<8x32xf32>
    %25 = vector.broadcast %22 : vector<1x32xf32> to vector<8x32xf32>
    %26 = arith.mulf %12, %25 : vector<8x32xf32>
    %27 = arith.addf %24, %26 : vector<8x32xf32>
    %28 = vector.broadcast %20 : vector<1x32xf32> to vector<8x32xf32>
    %29 = arith.mulf %13, %28 : vector<8x32xf32>
    %30 = vector.broadcast %22 : vector<1x32xf32> to vector<8x32xf32>
    %31 = arith.mulf %14, %30 : vector<8x32xf32>
    %32 = arith.addf %29, %31 : vector<8x32xf32>
    %cst_18 = arith.constant dense<0.000000e+00> : vector<8x8xf32>
    %33 = tpu.matmul %27, %32, %cst_18 {dimension_numbers = #tpu.dot_dimension_numbers<[1], [1], [0], [0], [0, 0, 1, 0], [], []>} : vector<8x32xf32>, vector<8x32xf32>, vector<8x8xf32> -> vector<8x8xf32>
    %cst_19 = arith.constant -1.000000e+30 : f32
    %34 = vector.broadcast %cst_19 : f32 to vector<8x8xf32>
    %35 = arith.select %17, %34, %33 : vector<8x8xi1>, vector<8x8xf32>
    %cst_20 = arith.constant dense<0xFF800000> : vector<8xf32>
    %36 = vector.multi_reduction <maximumf>, %35, %cst_20 [1] : vector<8x8xf32> to vector<8xf32>
    %37 = vector.shape_cast %36 : vector<8xf32> to vector<8x1xf32>
    %38 = vector.broadcast %37 : vector<8x1xf32> to vector<8x8xf32>
    %39 = arith.subf %35, %38 : vector<8x8xf32>
    %40 = math.exp %39 : vector<8x8xf32>
    %cst_21 = arith.constant dense<0.000000e+00> : vector<8xf32>
    %41 = vector.multi_reduction <add>, %40, %cst_21 [1] : vector<8x8xf32> to vector<8xf32>
    %42 = vector.shape_cast %41 : vector<8xf32> to vector<8x1xf32>
    %43 = tpu.reciprocal %42 : vector<8x1xf32> -> vector<8x1xf32>
    %44 = vector.broadcast %43 : vector<8x1xf32> to vector<8x8xf32>
    %45 = arith.mulf %40, %44 : vector<8x8xf32>
    %46 = arith.index_cast %c0_i32 : i32 to index
    %47 = memref.load %arg10[%46] : memref<4xf32, #tpu.memory_space<smem>>
    %48 = vector.broadcast %47 : f32 to vector<8x8xf32>
    %49 = arith.mulf %48, %45 : vector<8x8xf32>
    %50 = arith.addf %18, %49 : vector<8x8xf32>
    %c1_i32 = arith.constant 1 : i32
    %51 = arith.index_cast %c1_i32 : i32 to index
    %c0_22 = arith.constant 0 : index
    %52 = vector.load %arg4[%51, %c0_22] : memref<4x32xf32, #tpu.memory_space<vmem>>, vector<1x32xf32>
    %53 = arith.index_cast %c1_i32 : i32 to index
    %c0_23 = arith.constant 0 : index
    %54 = vector.load %arg5[%53, %c0_23] : memref<4x32xf32, #tpu.memory_space<vmem>>, vector<1x32xf32>
    %55 = vector.broadcast %52 : vector<1x32xf32> to vector<8x32xf32>
    %56 = arith.mulf %11, %55 : vector<8x32xf32>
    %57 = vector.broadcast %54 : vector<1x32xf32> to vector<8x32xf32>
    %58 = arith.mulf %12, %57 : vector<8x32xf32>
    %59 = arith.addf %56, %58 : vector<8x32xf32>
    %60 = vector.broadcast %52 : vector<1x32xf32> to vector<8x32xf32>
    %61 = arith.mulf %13, %60 : vector<8x32xf32>
    %62 = vector.broadcast %54 : vector<1x32xf32> to vector<8x32xf32>
    %63 = arith.mulf %14, %62 : vector<8x32xf32>
    %64 = arith.addf %61, %63 : vector<8x32xf32>
    %cst_24 = arith.constant dense<0.000000e+00> : vector<8x8xf32>
    %65 = tpu.matmul %59, %64, %cst_24 {dimension_numbers = #tpu.dot_dimension_numbers<[1], [1], [0], [0], [0, 0, 1, 0], [], []>} : vector<8x32xf32>, vector<8x32xf32>, vector<8x8xf32> -> vector<8x8xf32>
    %cst_25 = arith.constant -1.000000e+30 : f32
    %66 = vector.broadcast %cst_25 : f32 to vector<8x8xf32>
    %67 = arith.select %17, %66, %65 : vector<8x8xi1>, vector<8x8xf32>
    %cst_26 = arith.constant dense<0xFF800000> : vector<8xf32>
    %68 = vector.multi_reduction <maximumf>, %67, %cst_26 [1] : vector<8x8xf32> to vector<8xf32>
    %69 = vector.shape_cast %68 : vector<8xf32> to vector<8x1xf32>
    %70 = vector.broadcast %69 : vector<8x1xf32> to vector<8x8xf32>
    %71 = arith.subf %67, %70 : vector<8x8xf32>
    %72 = math.exp %71 : vector<8x8xf32>
    %cst_27 = arith.constant dense<0.000000e+00> : vector<8xf32>
    %73 = vector.multi_reduction <add>, %72, %cst_27 [1] : vector<8x8xf32> to vector<8xf32>
    %74 = vector.shape_cast %73 : vector<8xf32> to vector<8x1xf32>
    %75 = tpu.reciprocal %74 : vector<8x1xf32> -> vector<8x1xf32>
    %76 = vector.broadcast %75 : vector<8x1xf32> to vector<8x8xf32>
    %77 = arith.mulf %72, %76 : vector<8x8xf32>
    %78 = arith.index_cast %c1_i32 : i32 to index
    %79 = memref.load %arg10[%78] : memref<4xf32, #tpu.memory_space<smem>>
    %80 = vector.broadcast %79 : f32 to vector<8x8xf32>
    %81 = arith.mulf %80, %77 : vector<8x8xf32>
    %82 = arith.addf %50, %81 : vector<8x8xf32>
    %c2_i32 = arith.constant 2 : i32
    %83 = arith.index_cast %c2_i32 : i32 to index
    %c0_28 = arith.constant 0 : index
    %84 = vector.load %arg4[%83, %c0_28] : memref<4x32xf32, #tpu.memory_space<vmem>>, vector<1x32xf32>
    %85 = arith.index_cast %c2_i32 : i32 to index
    %c0_29 = arith.constant 0 : index
    %86 = vector.load %arg5[%85, %c0_29] : memref<4x32xf32, #tpu.memory_space<vmem>>, vector<1x32xf32>
    %87 = vector.broadcast %84 : vector<1x32xf32> to vector<8x32xf32>
    %88 = arith.mulf %11, %87 : vector<8x32xf32>
    %89 = vector.broadcast %86 : vector<1x32xf32> to vector<8x32xf32>
    %90 = arith.mulf %12, %89 : vector<8x32xf32>
    %91 = arith.addf %88, %90 : vector<8x32xf32>
    %92 = vector.broadcast %84 : vector<1x32xf32> to vector<8x32xf32>
    %93 = arith.mulf %13, %92 : vector<8x32xf32>
    %94 = vector.broadcast %86 : vector<1x32xf32> to vector<8x32xf32>
    %95 = arith.mulf %14, %94 : vector<8x32xf32>
    %96 = arith.addf %93, %95 : vector<8x32xf32>
    %cst_30 = arith.constant dense<0.000000e+00> : vector<8x8xf32>
    %97 = tpu.matmul %91, %96, %cst_30 {dimension_numbers = #tpu.dot_dimension_numbers<[1], [1], [0], [0], [0, 0, 1, 0], [], []>} : vector<8x32xf32>, vector<8x32xf32>, vector<8x8xf32> -> vector<8x8xf32>
    %cst_31 = arith.constant -1.000000e+30 : f32
    %98 = vector.broadcast %cst_31 : f32 to vector<8x8xf32>
    %99 = arith.select %17, %98, %97 : vector<8x8xi1>, vector<8x8xf32>
    %cst_32 = arith.constant dense<0xFF800000> : vector<8xf32>
    %100 = vector.multi_reduction <maximumf>, %99, %cst_32 [1] : vector<8x8xf32> to vector<8xf32>
    %101 = vector.shape_cast %100 : vector<8xf32> to vector<8x1xf32>
    %102 = vector.broadcast %101 : vector<8x1xf32> to vector<8x8xf32>
    %103 = arith.subf %99, %102 : vector<8x8xf32>
    %104 = math.exp %103 : vector<8x8xf32>
    %cst_33 = arith.constant dense<0.000000e+00> : vector<8xf32>
    %105 = vector.multi_reduction <add>, %104, %cst_33 [1] : vector<8x8xf32> to vector<8xf32>
    %106 = vector.shape_cast %105 : vector<8xf32> to vector<8x1xf32>
    %107 = tpu.reciprocal %106 : vector<8x1xf32> -> vector<8x1xf32>
    %108 = vector.broadcast %107 : vector<8x1xf32> to vector<8x8xf32>
    %109 = arith.mulf %104, %108 : vector<8x8xf32>
    %110 = arith.index_cast %c2_i32 : i32 to index
    %111 = memref.load %arg10[%110] : memref<4xf32, #tpu.memory_space<smem>>
    %112 = vector.broadcast %111 : f32 to vector<8x8xf32>
    %113 = arith.mulf %112, %109 : vector<8x8xf32>
    %114 = arith.addf %82, %113 : vector<8x8xf32>
    %c3_i32 = arith.constant 3 : i32
    %115 = arith.index_cast %c3_i32 : i32 to index
    %c0_34 = arith.constant 0 : index
    %116 = vector.load %arg4[%115, %c0_34] : memref<4x32xf32, #tpu.memory_space<vmem>>, vector<1x32xf32>
    %117 = arith.index_cast %c3_i32 : i32 to index
    %c0_35 = arith.constant 0 : index
    %118 = vector.load %arg5[%117, %c0_35] : memref<4x32xf32, #tpu.memory_space<vmem>>, vector<1x32xf32>
    %119 = vector.broadcast %116 : vector<1x32xf32> to vector<8x32xf32>
    %120 = arith.mulf %11, %119 : vector<8x32xf32>
    %121 = vector.broadcast %118 : vector<1x32xf32> to vector<8x32xf32>
    %122 = arith.mulf %12, %121 : vector<8x32xf32>
    %123 = arith.addf %120, %122 : vector<8x32xf32>
    %124 = vector.broadcast %116 : vector<1x32xf32> to vector<8x32xf32>
    %125 = arith.mulf %13, %124 : vector<8x32xf32>
    %126 = vector.broadcast %118 : vector<1x32xf32> to vector<8x32xf32>
    %127 = arith.mulf %14, %126 : vector<8x32xf32>
    %128 = arith.addf %125, %127 : vector<8x32xf32>
    %cst_36 = arith.constant dense<0.000000e+00> : vector<8x8xf32>
    %129 = tpu.matmul %123, %128, %cst_36 {dimension_numbers = #tpu.dot_dimension_numbers<[1], [1], [0], [0], [0, 0, 1, 0], [], []>} : vector<8x32xf32>, vector<8x32xf32>, vector<8x8xf32> -> vector<8x8xf32>
    %cst_37 = arith.constant -1.000000e+30 : f32
    %130 = vector.broadcast %cst_37 : f32 to vector<8x8xf32>
    %131 = arith.select %17, %130, %129 : vector<8x8xi1>, vector<8x8xf32>
    %cst_38 = arith.constant dense<0xFF800000> : vector<8xf32>
    %132 = vector.multi_reduction <maximumf>, %131, %cst_38 [1] : vector<8x8xf32> to vector<8xf32>
    %133 = vector.shape_cast %132 : vector<8xf32> to vector<8x1xf32>
    %134 = vector.broadcast %133 : vector<8x1xf32> to vector<8x8xf32>
    %135 = arith.subf %131, %134 : vector<8x8xf32>
    %136 = math.exp %135 : vector<8x8xf32>
    %cst_39 = arith.constant dense<0.000000e+00> : vector<8xf32>
    %137 = vector.multi_reduction <add>, %136, %cst_39 [1] : vector<8x8xf32> to vector<8xf32>
    %138 = vector.shape_cast %137 : vector<8xf32> to vector<8x1xf32>
    %139 = tpu.reciprocal %138 : vector<8x1xf32> -> vector<8x1xf32>
    %140 = vector.broadcast %139 : vector<8x1xf32> to vector<8x8xf32>
    %141 = arith.mulf %136, %140 : vector<8x8xf32>
    %142 = arith.index_cast %c3_i32 : i32 to index
    %143 = memref.load %arg10[%142] : memref<4xf32, #tpu.memory_space<smem>>
    %144 = vector.broadcast %143 : f32 to vector<8x8xf32>
    %145 = arith.mulf %144, %141 : vector<8x8xf32>
    %146 = arith.addf %114, %145 : vector<8x8xf32>
    %c4_i32 = arith.constant 4 : i32
    %147 = arith.cmpi eq, %15, %16 : vector<8x8xi32>
    %cst_40 = arith.constant 0.000000e+00 : f32
    %148 = vector.broadcast %cst_40 : f32 to vector<8x8xf32>
    %149 = arith.select %147, %148, %146 : vector<8x8xi1>, vector<8x8xf32>
    %cst_41 = arith.constant dense<0.000000e+00> : vector<8x32xf32>
    %150 = tpu.matmul %149, %5, %cst_41 {dimension_numbers = #tpu.dot_dimension_numbers<[0], [0], [1], [1], [0, 1, 1, 1], [], []>} : vector<8x8xf32>, vector<8x32xf32>, vector<8x32xf32> -> vector<8x32xf32>
    %c0_42 = arith.constant 0 : index
    %c0_43 = arith.constant 0 : index
    %151 = vector.load %arg8[%c0_42, %c0_43] : memref<8x1xf32, #tpu.memory_space<vmem>>, vector<8x1xf32>
    %152 = vector.broadcast %151 : vector<8x1xf32> to vector<8x32xf32>
    %153 = arith.mulf %150, %152 : vector<8x32xf32>
    %c0_44 = arith.constant 0 : index
    %c0_45 = arith.constant 0 : index
    %c0_46 = arith.constant 0 : index
    %154 = vector.load %arg11[%c0_44, %c0_45, %c0_46] : memref<1x8x32xf32, #tpu.memory_space<vmem>>, vector<1x8x32xf32>
    %155 = vector.shape_cast %154 : vector<1x8x32xf32> to vector<8x32xf32>
    %156 = vector.shape_cast %153 : vector<8x32xf32> to vector<1x8x32xf32>
    tpu.vector_store %arg11[%c0_44, %c0_45, %c0_46], %156 {strides = array<i32>} : memref<1x8x32xf32, #tpu.memory_space<vmem>>, vector<1x8x32xf32>,
    return
  }
  func.func @transform_0(%arg0: i32) -> (i32, i32, i32) {
    %c0_i32 = arith.constant 0 : i32
    %c0_i32_0 = arith.constant 0 : i32
    %c0_i32_1 = arith.constant 0 : i32
    return %arg0, %c0_i32, %c0_i32_0 : i32, i32, i32
  }
  func.func @transform_1(%arg0: i32) -> (i32, i32, i32) {
    %c0_i32 = arith.constant 0 : i32
    %c0_i32_0 = arith.constant 0 : i32
    %c0_i32_1 = arith.constant 0 : i32
    return %arg0, %c0_i32, %c0_i32_0 : i32, i32, i32
  }
  func.func @transform_2(%arg0: i32) -> (i32, i32, i32) {
    %c0_i32 = arith.constant 0 : i32
    %c0_i32_0 = arith.constant 0 : i32
    %c0_i32_1 = arith.constant 0 : i32
    return %arg0, %c0_i32, %c0_i32_0 : i32, i32, i32
  }
  func.func @transform_3(%arg0: i32) -> (i32, i32) {
    %c0_i32 = arith.constant 0 : i32
    %c0_i32_0 = arith.constant 0 : i32
    %c0_i32_1 = arith.constant 0 : i32
    return %c0_i32, %c0_i32_0 : i32, i32
  }
  func.func @transform_4(%arg0: i32) -> (i32, i32) {
    %c0_i32 = arith.constant 0 : i32
    %c0_i32_0 = arith.constant 0 : i32
    %c0_i32_1 = arith.constant 0 : i32
    return %c0_i32, %c0_i32_0 : i32, i32
  }
  func.func @transform_5(%arg0: i32) -> (i32, i32) {
    %c0_i32 = arith.constant 0 : i32
    %c0_i32_0 = arith.constant 0 : i32
    %c0_i32_1 = arith.constant 0 : i32
    return %c0_i32, %c0_i32_0 : i32, i32
  }
  func.func @transform_6(%arg0: i32) -> (i32, i32) {
    %c0_i32 = arith.constant 0 : i32
    %c0_i32_0 = arith.constant 0 : i32
    %c0_i32_1 = arith.constant 0 : i32
    return %c0_i32, %c0_i32_0 : i32, i32
  }
  func.func @transform_7(%arg0: i32) -> (i32, i32) {
    %c0_i32 = arith.constant 0 : i32
    %c0_i32_0 = arith.constant 0 : i32
    %c0_i32_1 = arith.constant 0 : i32
    return %c0_i32, %c0_i32_0 : i32, i32
  }
  func.func @transform_8(%arg0: i32) -> (i32, i32) {
    %c0_i32 = arith.constant 0 : i32
    %c0_i32_0 = arith.constant 0 : i32
    %c0_i32_1 = arith.constant 0 : i32
    return %c0_i32, %c0_i32_0 : i32, i32
  }
  func.func @transform_9(%arg0: i32) -> i32 {
    %c0_i32 = arith.constant 0 : i32
    %c0_i32_0 = arith.constant 0 : i32
    return %c0_i32 : i32
  }
  func.func @transform_10(%arg0: i32) -> (i32, i32, i32) {
    %c0_i32 = arith.constant 0 : i32
    %c0_i32_0 = arith.constant 0 : i32
    %c0_i32_1 = arith.constant 0 : i32
    return %arg0, %c0_i32, %c0_i32_0 : i32, i32, i32
  }
}

</mosaic_0001>

<llo_original>
// kernel: tpu_custom_call.1
$region0: #{tpu_custom_call.1}
  #allocation0 [shape = 'u32[]', space=smem, size = 0x4, offset = 0x4, fixed_abs, tag = 'smem constant byte address 0x4 - core index']
  #allocation1 [shape = 'u32[144,128]{1,0:T(1,128)}', space=vmem, size = 0x12000, scoped, tag = 'internal scratch']
  %s0 = inlined_call_operand.hbm [shape: f32[2,8,32], index: 0, kind: input, shape index: {}]
  %s1 = inlined_call_operand.hbm [shape: f32[2,8,32], index: 1, kind: input, shape index: {}]
  %s2 = inlined_call_operand.hbm [shape: f32[2,8,32], index: 2, kind: input, shape index: {}]
  %s3 = inlined_call_operand.vmem [shape: f32[4,32], index: 3, kind: input, shape index: {}]
  %s4 = inlined_call_operand.hbm [shape: f32[4,32], index: 4, kind: input, shape index: {}]
  %s5 = inlined_call_operand.hbm [shape: f32[8,32], index: 5, kind: input, shape index: {}]
  %s6 = inlined_call_operand.hbm [shape: f32[8,32], index: 6, kind: input, shape index: {}]
  %s7 = inlined_call_operand.vmem [shape: f32[8,1], index: 7, kind: input, shape index: {}]
  %s8 = inlined_call_operand.vmem [shape: f32[32,32], index: 8, kind: input, shape index: {}]
  %s9 = inlined_call_operand.vmem [shape: f32[4], index: 9, kind: input, shape index: {}]
  %s10 = inlined_call_operand.hbm [shape: f32[2,8,32], index: 10, kind: output, shape index: {}]
  %s11 = sld [smem:[#allocation0]]
  $region101: #{tpu_custom_call.1} parent=0
    _
  %s13 = ssub.s32 1, %s11
  %s14 = scalar_select 0, %s13, %s11
  $region1: #{tpu_custom_call.1} parent=0
    #allocation2 [shape = 'u8[8192]{0}', space=vmem, size = 0x2000, scoped, tag = 'input window, operand 0']
    #allocation3 [shape = 's32[2]{0}', space=sflag, size = 0x8, scoped, tag = 'scoped memory for tpu_custom_call.1']
    #allocation4 [shape = 's32[2]{0}', space=sflag, size = 0x8, scoped, tag = 'scoped memory for tpu_custom_call.1']
    #allocation5 [shape = 's32[2]{0}', space=sflag, size = 0x8, scoped, tag = 'scoped memory for tpu_custom_call.1']
    #allocation6 [shape = 'u8[8192]{0}', space=vmem, size = 0x2000, scoped, tag = 'input window, operand 1']
    #allocation7 [shape = 's32[2]{0}', space=sflag, size = 0x8, scoped, tag = 'scoped memory for tpu_custom_call.1']
    #allocation8 [shape = 'u8[8192]{0}', space=vmem, size = 0x2000, scoped, tag = 'input window, operand 2']
    #allocation9 [shape = 'u8[2048]{0}', space=vmem, size = 0x800, scoped, tag = 'input window, operand 4, single buffered']
    #allocation10 [shape = 's32[1]{0}', space=sflag, size = 0x4, scoped, tag = 'scoped memory for tpu_custom_call.1']
    #allocation11 [shape = 'u8[4096]{0}', space=vmem, size = 0x1000, scoped, tag = 'input window, operand 5, single buffered']
    #allocation12 [shape = 'u8[4096]{0}', space=vmem, size = 0x1000, scoped, tag = 'input window, operand 6, single buffered']
    #allocation13 [shape = 's32[1]{0}', space=sflag, size = 0x4, scoped, tag = 'scoped memory for tpu_custom_call.1']
    #allocation14 [shape = 'u8[512]{0}', space=smem, size = 0x200, scoped, tag = 'input window, operand 9, single buffered']
    #allocation15 [shape = 'u8[8192]{0}', space=vmem, size = 0x2000, scoped, tag = 'output window, operand 0']
    %15 = vsyncpa [#allocation3], 0
    %s16 = scalar_lea.sflag [#allocation3], 1
    %17 = vsyncpa %s16, 0
    %18 = vsyncpa [#allocation7], 0
    %s19 = scalar_lea.sflag [#allocation7], 1
    %20 = vsyncpa %s19, 0
    %21 = vsyncpa [#allocation10], 0
    %22 = vsyncpa [#allocation13], 0
    %23 = vsyncpa [#allocation5], 0
    %24 = vsyncpa [#allocation4], 0
    %s25 = scalar_lea.sflag [#allocation4], 1
    %26 = vsyncpa %s25, 0
    loop: start=0, step=1, limit=4
    $region2: #{tpu_custom_call.1} parent=1 // loop_pre_header
      _
    $region3: #{tpu_custom_call.1} parent=1 // loop_header
      %s28 = sphi 0, %s32
      %p29 = scmp.ge.s32.totalorder %s28, 4
      %s38 = sphi 0, %s40
      %s41 = sphi 0, %s38
      %s42 = sphi 0, %s41
      %s58 = sphi 0, %s42
      %s64 = sphi 0, %s66
      %s67 = sphi 0, %s64
      %s68 = sphi 0, %s67
      %s84 = sphi 0, %s68
      %s90 = sphi 0, %s92
      %s93 = sphi 0, %s90
      %s94 = sphi 0, %s93
      %s110 = sphi 0, %s94
      %s114 = sphi 0, %s114
      %s116 = sphi 0, %s114
      %s117 = sphi 0, %s116
      %s131 = sphi 0, %s117
      %s135 = sphi 0, %s135
      %s137 = sphi 0, %s135
      %s138 = sphi 0, %s137
      %s152 = sphi 0, %s138
      %s156 = sphi 0, %s156
      %s158 = sphi 0, %s156
      %s159 = sphi 0, %s158
      %s173 = sphi 0, %s159
      %s177 = sphi 0, %s177
      %s179 = sphi 0, %s177
      %s180 = sphi 0, %s179
      %s194 = sphi 0, %s180
      %s198 = sphi 0, %s198
      %s200 = sphi 0, %s198
      %s201 = sphi 0, %s200
      %s215 = sphi 0, %s201
      %s219 = sphi 0, %s219
      %s221 = sphi 0, %s219
      %s222 = sphi 0, %s221
      %s236 = sphi 0, %s222
      %s240 = sphi 0, %s240
      %s242 = sphi 0, %s240
      %s243 = sphi 0, %s242
      %s257 = sphi 0, %s243
      %s263 = sphi 0, %s265
      %s266 = sphi 0, %s263
      %s267 = sphi 0, %s266
      %s283 = sphi 0, %s267
    $region4: #{tpu_custom_call.1} parent=1 // loop_header_branch
      %31 = sbr.rel (%p29) target = $region8
    $region5: #{tpu_custom_call.1} parent=1 // loop_body
      %s33 = ssub.s32 %s28, 1
      %s34 = ssub.s32 %s28, 2
      %s35 = sadd.s32 %s28, 1
      %s36 = ssub.s32 %s28, %s35
      %p37 = scmp.eq.s32.totalorder %s36, 0
      %s39 = sadd.s32 %s38, 1
      %s40 = scalar_select %p37, %s38, %s39
      %p43 = pneg %p37
      %p44 = scmp.eq.s32.totalorder %s28, 1
      %p45 = por %p43, %p44
      %p46 = scmp.ne.s32.totalorder %s38, %s41
      %p47 = scmp.eq.s32.totalorder %s28, 0
      %p48 = por %p46, %p47
      %p49 = scmp.ne.s32.totalorder %s38, %s41
      %p50 = scmp.eq.s32.totalorder %s33, 1
      %p51 = por %p49, %p50
      %p52 = scmp.ne.s32.totalorder %s41, %s42
      %p53 = scmp.eq.s32.totalorder %s33, 0
      %p54 = por %p52, %p53
      %p55 = scmp.ne.s32.totalorder %s41, %s42
      %p56 = scmp.eq.s32.totalorder %s34, 1
      %p57 = por %p55, %p56
      %p59 = scmp.ne.s32.totalorder %s42, %s58
      %p60 = scmp.eq.s32.totalorder %s34, 0
      %p61 = por %p59, %p60
      %s62 = ssub.s32 %s28, %s35
      %p63 = scmp.eq.s32.totalorder %s62, 0
      %s65 = sadd.s32 %s64, 1
      %s66 = scalar_select %p63, %s64, %s65
      %p69 = pneg %p63
      %p70 = scmp.eq.s32.totalorder %s28, 1
      %p71 = por %p69, %p70
      %p72 = scmp.ne.s32.totalorder %s64, %s67
      %p73 = scmp.eq.s32.totalorder %s28, 0
      %p74 = por %p72, %p73
      %p75 = scmp.ne.s32.totalorder %s64, %s67
      %p76 = scmp.eq.s32.totalorder %s33, 1
      %p77 = por %p75, %p76
      %p78 = scmp.ne.s32.totalorder %s67, %s68
      %p79 = scmp.eq.s32.totalorder %s33, 0
      %p80 = por %p78, %p79
      %p81 = scmp.ne.s32.totalorder %s67, %s68
      %p82 = scmp.eq.s32.totalorder %s34, 1
      %p83 = por %p81, %p82
      %p85 = scmp.ne.s32.totalorder %s68, %s84
      %p86 = scmp.eq.s32.totalorder %s34, 0
      %p87 = por %p85, %p86
      %s88 = ssub.s32 %s28, %s35
      %p89 = scmp.eq.s32.totalorder %s88, 0
      %s91 = sadd.s32 %s90, 1
      %s92 = scalar_select %p89, %s90, %s91
      %p95 = pneg %p89
      %p96 = scmp.eq.s32.totalorder %s28, 1
      %p97 = por %p95, %p96
      %p98 = scmp.ne.s32.totalorder %s90, %s93
      %p99 = scmp.eq.s32.totalorder %s28, 0
      %p100 = por %p98, %p99
      %p101 = scmp.ne.s32.totalorder %s90, %s93
      %p102 = scmp.eq.s32.totalorder %s33, 1
      %p103 = por %p101, %p102
      %p104 = scmp.ne.s32.totalorder %s93, %s94
      %p105 = scmp.eq.s32.totalorder %s33, 0
      %p106 = por %p104, %p105
      %p107 = scmp.ne.s32.totalorder %s93, %s94
      %p108 = scmp.eq.s32.totalorder %s34, 1
      %p109 = por %p107, %p108
      %p111 = scmp.ne.s32.totalorder %s94, %s110
      %p112 = scmp.eq.s32.totalorder %s34, 0
      %p113 = por %p111, %p112
      %s115 = sadd.s32 %s114, 1
      %p118 = scmp.eq.s32.totalorder %s28, 1
      %p119 = scmp.ne.s32.totalorder %s114, %s116
      %p120 = scmp.eq.s32.totalorder %s28, 0
      %p121 = por %p119, %p120
      %p122 = scmp.ne.s32.totalorder %s114, %s116
      %p123 = scmp.eq.s32.totalorder %s33, 1
      %p124 = por %p122, %p123
      %p125 = scmp.ne.s32.totalorder %s116, %s117
      %p126 = scmp.eq.s32.totalorder %s33, 0
      %p127 = por %p125, %p126
      %p128 = scmp.ne.s32.totalorder %s116, %s117
      %p129 = scmp.eq.s32.totalorder %s34, 1
      %p130 = por %p128, %p129
      %p132 = scmp.ne.s32.totalorder %s117, %s131
      %p133 = scmp.eq.s32.totalorder %s34, 0
      %p134 = por %p132, %p133
      %s136 = sadd.s32 %s135, 1
      %p139 = scmp.eq.s32.totalorder %s28, 1
      %p140 = scmp.ne.s32.totalorder %s135, %s137
      %p141 = scmp.eq.s32.totalorder %s28, 0
      %p142 = por %p140, %p141
      %p143 = scmp.ne.s32.totalorder %s135, %s137
      %p144 = scmp.eq.s32.totalorder %s33, 1
      %p145 = por %p143, %p144
      %p146 = scmp.ne.s32.totalorder %s137, %s138
      %p147 = scmp.eq.s32.totalorder %s33, 0
      %p148 = por %p146, %p147
      %p149 = scmp.ne.s32.totalorder %s137, %s138
      %p150 = scmp.eq.s32.totalorder %s34, 1
      %p151 = por %p149, %p150
      %p153 = scmp.ne.s32.totalorder %s138, %s152
      %p154 = scmp.eq.s32.totalorder %s34, 0
      %p155 = por %p153, %p154
      %s157 = sadd.s32 %s156, 1
      %p160 = scmp.eq.s32.totalorder %s28, 1
      %p161 = scmp.ne.s32.totalorder %s156, %s158
      %p162 = scmp.eq.s32.totalorder %s28, 0
      %p163 = por %p161, %p162
      %p164 = scmp.ne.s32.totalorder %s156, %s158
      %p165 = scmp.eq.s32.totalorder %s33, 1
      %p166 = por %p164, %p165
      %p167 = scmp.ne.s32.totalorder %s158, %s159
      %p168 = scmp.eq.s32.totalorder %s33, 0
      %p169 = por %p167, %p168
      %p170 = scmp.ne.s32.totalorder %s158, %s159
      %p171 = scmp.eq.s32.totalorder %s34, 1
      %p172 = por %p170, %p171
      %p174 = scmp.ne.s32.totalorder %s159, %s173
      %p175 = scmp.eq.s32.totalorder %s34, 0
      %p176 = por %p174, %p175
      %s178 = sadd.s32 %s177, 1
      %p181 = scmp.eq.s32.totalorder %s28, 1
      %p182 = scmp.ne.s32.totalorder %s177, %s179
      %p183 = scmp.eq.s32.totalorder %s28, 0
      %p184 = por %p182, %p183
      %p185 = scmp.ne.s32.totalorder %s177, %s179
      %p186 = scmp.eq.s32.totalorder %s33, 1
      %p187 = por %p185, %p186
      %p188 = scmp.ne.s32.totalorder %s179, %s180
      %p189 = scmp.eq.s32.totalorder %s33, 0
      %p190 = por %p188, %p189
      %p191 = scmp.ne.s32.totalorder %s179, %s180
      %p192 = scmp.eq.s32.totalorder %s34, 1
      %p193 = por %p191, %p192
      %p195 = scmp.ne.s32.totalorder %s180, %s194
      %p196 = scmp.eq.s32.totalorder %s34, 0
      %p197 = por %p195, %p196
      %s199 = sadd.s32 %s198, 1
      %p202 = scmp.eq.s32.totalorder %s28, 1
      %p203 = scmp.ne.s32.totalorder %s198, %s200
      %p204 = scmp.eq.s32.totalorder %s28, 0
      %p205 = por %p203, %p204
      %p206 = scmp.ne.s32.totalorder %s198, %s200
      %p207 = scmp.eq.s32.totalorder %s33, 1
      %p208 = por %p206, %p207
      %p209 = scmp.ne.s32.totalorder %s200, %s201
      %p210 = scmp.eq.s32.totalorder %s33, 0
      %p211 = por %p209, %p210
      %p212 = scmp.ne.s32.totalorder %s200, %s201
      %p213 = scmp.eq.s32.totalorder %s34, 1
      %p214 = por %p212, %p213
      %p216 = scmp.ne.s32.totalorder %s201, %s215
      %p217 = scmp.eq.s32.totalorder %s34, 0
      %p218 = por %p216, %p217
      %s220 = sadd.s32 %s219, 1
      %p223 = scmp.eq.s32.totalorder %s28, 1
      %p224 = scmp.ne.s32.totalorder %s219, %s221
      %p225 = scmp.eq.s32.totalorder %s28, 0
      %p226 = por %p224, %p225
      %p227 = scmp.ne.s32.totalorder %s219, %s221
      %p228 = scmp.eq.s32.totalorder %s33, 1
      %p229 = por %p227, %p228
      %p230 = scmp.ne.s32.totalorder %s221, %s222
      %p231 = scmp.eq.s32.totalorder %s33, 0
      %p232 = por %p230, %p231
      %p233 = scmp.ne.s32.totalorder %s221, %s222
      %p234 = scmp.eq.s32.totalorder %s34, 1
      %p235 = por %p233, %p234
      %p237 = scmp.ne.s32.totalorder %s222, %s236
      %p238 = scmp.eq.s32.totalorder %s34, 0
      %p239 = por %p237, %p238
      %s241 = sadd.s32 %s240, 1
      %p244 = scmp.eq.s32.totalorder %s28, 1
      %p245 = scmp.ne.s32.totalorder %s240, %s242
      %p246 = scmp.eq.s32.totalorder %s28, 0
      %p247 = por %p245, %p246
      %p248 = scmp.ne.s32.totalorder %s240, %s242
      %p249 = scmp.eq.s32.totalorder %s33, 1
      %p250 = por %p248, %p249
      %p251 = scmp.ne.s32.totalorder %s242, %s243
      %p252 = scmp.eq.s32.totalorder %s33, 0
      %p253 = por %p251, %p252
      %p254 = scmp.ne.s32.totalorder %s242, %s243
      %p255 = scmp.eq.s32.totalorder %s34, 1
      %p256 = por %p254, %p255
      %p258 = scmp.ne.s32.totalorder %s243, %s257
      %p259 = scmp.eq.s32.totalorder %s34, 0
      %p260 = por %p258, %p259
      %s261 = ssub.s32 %s28, %s35
      %p262 = scmp.eq.s32.totalorder %s261, 0
      %s264 = sadd.s32 %s263, 1
      %s265 = scalar_select %p262, %s263, %s264
      %p268 = pneg %p262
      %p269 = scmp.eq.s32.totalorder %s28, 1
      %p270 = por %p268, %p269
      %p271 = scmp.ne.s32.totalorder %s263, %s266
      %p272 = scmp.eq.s32.totalorder %s28, 0
      %p273 = por %p271, %p272
      %p274 = scmp.ne.s32.totalorder %s263, %s266
      %p275 = scmp.eq.s32.totalorder %s33, 1
      %p276 = por %p274, %p275
      %p277 = scmp.ne.s32.totalorder %s266, %s267
      %p278 = scmp.eq.s32.totalorder %s33, 0
      %p279 = por %p277, %p278
      %p280 = scmp.ne.s32.totalorder %s266, %s267
      %p281 = scmp.eq.s32.totalorder %s34, 1
      %p282 = por %p280, %p281
      %p284 = scmp.ne.s32.totalorder %s267, %s283
      %p285 = scmp.eq.s32.totalorder %s34, 0
      %p286 = por %p284, %p285
      %p287 = scmp.le.s32.totalorder 1, %s28
      %p288 = scmp.lt.s32.totalorder %s28, 3
      %p289 = pnand %p287, %p288
      %p290 = pneg %p289
      // Predicated region
      $region9: #{tpu_custom_call.1} parent=5 // pred_check
        _
      $region10: #{tpu_custom_call.1} parent=5 // pred_check_branch
        %292 = sbr.rel (%p289) target = $region12
      $region11: #{tpu_custom_call.1} parent=5 // pred_region
        %s293 = ssub.s32 %s28, 1
        // Predicated region
        $region13: #{tpu_custom_call.1} parent=11 // pred_check
          %p294 = pneg %p127
        $region14: #{tpu_custom_call.1} parent=11 // pred_check_branch
          %296 = sbr.rel (%p294) target = $region16
        $region15: #{tpu_custom_call.1} parent=11 // pred_region
          _
        $region16: #{tpu_custom_call.1} parent=11 // pred_fallthru
          _
        // Predicated region
        $region17: #{tpu_custom_call.1} parent=11 // pred_check
          %p297 = pneg %p148
        $region18: #{tpu_custom_call.1} parent=11 // pred_check_branch
          %299 = sbr.rel (%p297) target = $region20
        $region19: #{tpu_custom_call.1} parent=11 // pred_region
          %s301 = ssub.s32 64, 64
          %302 = vsyncadd [#allocation10], %s301
          %s304 = sshll.u32 [#allocation9], 4
          %s305 = int_to_ptr.vmem [resolvable:$true] %s304
          %307 = dma.hbm_to_vmem [thread:$0]  %s4, 64, %s305, [#allocation10]
        $region20: #{tpu_custom_call.1} parent=11 // pred_fallthru
          _
        // Predicated region
        $region21: #{tpu_custom_call.1} parent=11 // pred_check
          %p308 = pneg %p169
        $region22: #{tpu_custom_call.1} parent=11 // pred_check_branch
          %310 = sbr.rel (%p308) target = $region24
        $region23: #{tpu_custom_call.1} parent=11 // pred_region
          %s312 = ssub.s32 128, 128
          %313 = vsyncadd [#allocation10], %s312
          %s315 = sshll.u32 [#allocation11], 4
          %s316 = int_to_ptr.vmem [resolvable:$true] %s315
          %318 = dma.hbm_to_vmem [thread:$0]  %s5, 128, %s316, [#allocation10]
        $region24: #{tpu_custom_call.1} parent=11 // pred_fallthru
          _
        // Predicated region
        $region25: #{tpu_custom_call.1} parent=11 // pred_check
          %p319 = pneg %p190
        $region26: #{tpu_custom_call.1} parent=11 // pred_check_branch
          %321 = sbr.rel (%p319) target = $region28
        $region27: #{tpu_custom_call.1} parent=11 // pred_region
          %s323 = ssub.s32 128, 128
          %324 = vsyncadd [#allocation13], %s323
          %s326 = sshll.u32 [#allocation12], 4
          %s327 = int_to_ptr.vmem [resolvable:$true] %s326
          %329 = dma.hbm_to_vmem [thread:$0]  %s6, 128, %s327, [#allocation13]
        $region28: #{tpu_custom_call.1} parent=11 // pred_fallthru
          _
        // Predicated region
        $region29: #{tpu_custom_call.1} parent=11 // pred_check
          %p330 = pneg %p211
        $region30: #{tpu_custom_call.1} parent=11 // pred_check_branch
          %332 = sbr.rel (%p330) target = $region32
        $region31: #{tpu_custom_call.1} parent=11 // pred_region
          _
        $region32: #{tpu_custom_call.1} parent=11 // pred_fallthru
          _
        // Predicated region
        $region33: #{tpu_custom_call.1} parent=11 // pred_check
          %p333 = pneg %p232
        $region34: #{tpu_custom_call.1} parent=11 // pred_check_branch
          %335 = sbr.rel (%p333) target = $region36
        $region35: #{tpu_custom_call.1} parent=11 // pred_region
          _
        $region36: #{tpu_custom_call.1} parent=11 // pred_fallthru
          _
        // Predicated region
        $region37: #{tpu_custom_call.1} parent=11 // pred_check
          %p336 = pneg %p253
        $region38: #{tpu_custom_call.1} parent=11 // pred_check_branch
          %338 = sbr.rel (%p336) target = $region40
        $region39: #{tpu_custom_call.1} parent=11 // pred_region
          %s340 = ssub.s32 16, 16
          %341 = vsyncadd [#allocation5], %s340
          %s343 = sshll.u32 %s9, 4
          %s344 = int_to_ptr.vmem [resolvable:$true] %s343
          %346 = dma.vmem_to_smem %s344, 16, [#allocation14], [#allocation5]
        $region40: #{tpu_custom_call.1} parent=11 // pred_fallthru
          _
      $region12: #{tpu_custom_call.1} parent=5 // pred_fallthru
        _
      %p347 = scmp.lt.s32.totalorder %s28, 2
      // Predicated region
      $region41: #{tpu_custom_call.1} parent=5 // pred_check
        %p348 = pneg %p347
      $region42: #{tpu_custom_call.1} parent=5 // pred_check_branch
        %350 = sbr.rel (%p348) target = $region44
      $region43: #{tpu_custom_call.1} parent=5 // pred_region
        // Predicated region
        $region45: #{tpu_custom_call.1} parent=43 // pred_check
          %p351 = pneg %p48
        $region46: #{tpu_custom_call.1} parent=43 // pred_check_branch
          %353 = sbr.rel (%p351) target = $region48
        $region47: #{tpu_custom_call.1} parent=43 // pred_region
          %s354 = sand.u32 %s38, 1
          %s355 = scalar_lea.sflag [#allocation3], %s354
          %s356 = sand.u32 %s38, 1
          %s357 = smul.addr %s356, 8
          %s358 = scalar_lea.vmem [#allocation2], %s357
          %s360 = ssub.s32 128, 128
          %361 = vsyncadd %s355, %s360
          %s362 = smul.addr %s28, 128
          %s363 = scalar_lea.hbm %s0, %s362
          %s365 = sshll.u32 %s358, 4
          %s366 = int_to_ptr.vmem [resolvable:$true] %s365
          %368 = dma.hbm_to_vmem [thread:$0]  %s363, 128, %s366, %s355
        $region48: #{tpu_custom_call.1} parent=43 // pred_fallthru
          _
        // Predicated region
        $region49: #{tpu_custom_call.1} parent=43 // pred_check
          %p369 = pneg %p74
        $region50: #{tpu_custom_call.1} parent=43 // pred_check_branch
          %371 = sbr.rel (%p369) target = $region52
        $region51: #{tpu_custom_call.1} parent=43 // pred_region
          %s372 = sand.u32 %s28, 1
          %s373 = scalar_lea.sflag [#allocation7], %s372
          %s374 = sand.u32 %s64, 1
          %s375 = smul.addr %s374, 8
          %s376 = scalar_lea.vmem [#allocation6], %s375
          %s378 = ssub.s32 128, 128
          %379 = vsyncadd %s373, %s378
          %s380 = smul.addr %s28, 128
          %s381 = scalar_lea.hbm %s1, %s380
          %s383 = sshll.u32 %s376, 4
          %s384 = int_to_ptr.vmem [resolvable:$true] %s383
          %386 = dma.hbm_to_vmem [thread:$0]  %s381, 128, %s384, %s373
        $region52: #{tpu_custom_call.1} parent=43 // pred_fallthru
          _
        // Predicated region
        $region53: #{tpu_custom_call.1} parent=43 // pred_check
          %p387 = pneg %p100
        $region54: #{tpu_custom_call.1} parent=43 // pred_check_branch
          %389 = sbr.rel (%p387) target = $region56
        $region55: #{tpu_custom_call.1} parent=43 // pred_region
          %s390 = sand.u32 %s28, 1
          %s391 = scalar_lea.sflag [#allocation7], %s390
          %s392 = sand.u32 %s90, 1
          %s393 = smul.addr %s392, 8
          %s394 = scalar_lea.vmem [#allocation8], %s393
          %s396 = ssub.s32 128, 128
          %397 = vsyncadd %s391, %s396
          %s398 = smul.addr %s28, 128
          %s399 = scalar_lea.hbm %s2, %s398
          %s401 = sshll.u32 %s394, 4
          %s402 = int_to_ptr.vmem [resolvable:$true] %s401
          %404 = dma.hbm_to_vmem [thread:$0]  %s399, 128, %s402, %s391
        $region56: #{tpu_custom_call.1} parent=43 // pred_fallthru
          _
      $region44: #{tpu_custom_call.1} parent=5 // pred_fallthru
        _
      %p405 = scmp.le.s32.totalorder 1, %s28
      %p406 = scmp.lt.s32.totalorder %s28, 3
      %p407 = pnand %p405, %p406
      %p408 = pneg %p407
      // Predicated region
      $region57: #{tpu_custom_call.1} parent=5 // pred_check
        _
      $region58: #{tpu_custom_call.1} parent=5 // pred_check_branch
        %410 = sbr.rel (%p407) target = $region60
      $region59: #{tpu_custom_call.1} parent=5 // pred_region
        %s411 = ssub.s32 %s28, 1
        %s412 = sand.u32 %s41, 1
        %s413 = scalar_lea.sflag [#allocation3], %s412
        %s414 = sand.u32 %s41, 1
        %s415 = smul.addr %s414, 8
        %s416 = scalar_lea.vmem [#allocation2], %s415
        // Predicated region
        $region61: #{tpu_custom_call.1} parent=59 // pred_check
          %p417 = pneg %p54
        $region62: #{tpu_custom_call.1} parent=59 // pred_check_branch
          %419 = sbr.rel (%p417) target = $region64
        $region63: #{tpu_custom_call.1} parent=59 // pred_region
          %420 = dma.done %s413, 128
        $region64: #{tpu_custom_call.1} parent=59 // pred_fallthru
          _
        %s421 = sand.u32 %s33, 1
        %s422 = scalar_lea.sflag [#allocation7], %s421
        %s423 = sand.u32 %s67, 1
        %s424 = smul.addr %s423, 8
        %s425 = scalar_lea.vmem [#allocation6], %s424
        // Predicated region
        $region65: #{tpu_custom_call.1} parent=59 // pred_check
          %p426 = pneg %p80
        $region66: #{tpu_custom_call.1} parent=59 // pred_check_branch
          %428 = sbr.rel (%p426) target = $region68
        $region67: #{tpu_custom_call.1} parent=59 // pred_region
          %429 = dma.done %s422, 128
        $region68: #{tpu_custom_call.1} parent=59 // pred_fallthru
          _
        %s430 = sand.u32 %s33, 1
        %s431 = scalar_lea.sflag [#allocation7], %s430
        %s432 = sand.u32 %s93, 1
        %s433 = smul.addr %s432, 8
        %s434 = scalar_lea.vmem [#allocation8], %s433
        // Predicated region
        $region69: #{tpu_custom_call.1} parent=59 // pred_check
          %p435 = pneg %p106
        $region70: #{tpu_custom_call.1} parent=59 // pred_check_branch
          %437 = sbr.rel (%p435) target = $region72
        $region71: #{tpu_custom_call.1} parent=59 // pred_region
          %438 = dma.done %s431, 128
        $region72: #{tpu_custom_call.1} parent=59 // pred_fallthru
          _
        // Predicated region
        $region73: #{tpu_custom_call.1} parent=59 // pred_check
          %p439 = pneg %p148
        $region74: #{tpu_custom_call.1} parent=59 // pred_check_branch
          %441 = sbr.rel (%p439) target = $region76
        $region75: #{tpu_custom_call.1} parent=59 // pred_region
          %442 = dma.done [#allocation10], 64
        $region76: #{tpu_custom_call.1} parent=59 // pred_fallthru
          _
        // Predicated region
        $region77: #{tpu_custom_call.1} parent=59 // pred_check
          %p443 = pneg %p169
        $region78: #{tpu_custom_call.1} parent=59 // pred_check_branch
          %445 = sbr.rel (%p443) target = $region80
        $region79: #{tpu_custom_call.1} parent=59 // pred_region
          %446 = dma.done [#allocation10], 128
        $region80: #{tpu_custom_call.1} parent=59 // pred_fallthru
          _
        // Predicated region
        $region81: #{tpu_custom_call.1} parent=59 // pred_check
          %p447 = pneg %p190
        $region82: #{tpu_custom_call.1} parent=59 // pred_check_branch
          %449 = sbr.rel (%p447) target = $region84
        $region83: #{tpu_custom_call.1} parent=59 // pred_region
          %450 = dma.done [#allocation13], 128
        $region84: #{tpu_custom_call.1} parent=59 // pred_fallthru
          _
        // Predicated region
        $region85: #{tpu_custom_call.1} parent=59 // pred_check
          %p451 = pneg %p253
        $region86: #{tpu_custom_call.1} parent=59 // pred_check_branch
          %453 = sbr.rel (%p451) target = $region88
        $region87: #{tpu_custom_call.1} parent=59 // pred_region
          %454 = dma.done [#allocation5], 16
        $region88: #{tpu_custom_call.1} parent=59 // pred_fallthru
          _
        %455 = sfence
        %s456 = sand.u32 %s41, 1
        %s457 = scalar_lea.sflag [#allocation3], %s456
        %s458 = sand.u32 %s41, 1
        %s459 = smul.addr %s458, 8
        %s460 = scalar_lea.vmem [#allocation2], %s459
        %p461 = pneg %p54
        %p462 = pneg %p51
        %s463 = sand.u32 %s33, 1
        %s464 = scalar_lea.sflag [#allocation7], %s463
        %s465 = sand.u32 %s67, 1
        %s466 = smul.addr %s465, 8
        %s467 = scalar_lea.vmem [#allocation6], %s466
        %p468 = pneg %p80
        %p469 = pneg %p77
        %s470 = sand.u32 %s33, 1
        %s471 = scalar_lea.sflag [#allocation7], %s470
        %s472 = sand.u32 %s93, 1
        %s473 = smul.addr %s472, 8
        %s474 = scalar_lea.vmem [#allocation8], %s473
        %p475 = pneg %p106
        %p476 = pneg %p103
        %p477 = pneg %p127
        %p478 = pneg %p124
        %p479 = pneg %p148
        %p480 = pneg %p145
        %p481 = pneg %p169
        %p482 = pneg %p166
        %p483 = pneg %p190
        %p484 = pneg %p187
        %p485 = pneg %p211
        %p486 = pneg %p208
        %p487 = pneg %p232
        %p488 = pneg %p229
        %p489 = pneg %p253
        %p490 = pneg %p250
        %p491 = pneg %p279
        %p492 = pneg %p276
        %s493 = sand.u32 %s266, 1
        %s494 = scalar_lea.sflag [#allocation4], %s493
        %s495 = sand.u32 %s266, 1
        %s496 = smul.addr %s495, 8
        %s497 = scalar_lea.vmem [#allocation15], %s496
        %v498 = vld [vmem:[%s416] sm:$0xff]
        %v499 = vld [vmem:[%s425] sm:$0xff]
        %v500 = vld [vmem:[%s434] sm:$0xff]
        %v501 = vld [vmem:[#allocation11] sm:$0xff]
        %v502 = vld [vmem:[#allocation12] sm:$0xff]
        %v503 = vld [vmem:[%s8] sm:$0xff]
        %v504 = vld [vmem:[%s8 + $0x8] sm:$0xff]
        %v505 = vld [vmem:[%s8 + $0x10] sm:$0xff]
        %v506 = vld [vmem:[%s8 + $0x18] sm:$0xff]
        %vm507 = vcmask 261120
        %v509 = vsel %vm507, %v498, 0
        %511 = vmatprep.subr.mxu0 0.0
        %512 = vmatpush1.msra.mxu0 %v503
        %513 = vmatprep.subr.mxu0 0.0
        %514 = vmatpush1.msra.mxu0 %v504
        %515 = vmatprep.subr.mxu0 0.0
        %516 = vmatpush1.msra.mxu0 %v505
        %517 = vmatprep.subr.mxu0 0.0
        %518 = vmatpush1.msra.mxu0 %v506
        %519 = vmatprep.subr.mxu0 0.0
        %520 = vmatpush1.msra.mxu0 0.0
        %521 = vmatprep.subr.mxu0 0.0
        %522 = vmatpush1.msra.mxu0 0.0
        %523 = vmatprep.subr.mxu0 0.0
        %524 = vmatpush1.msra.mxu0 0.0
        %525 = vmatprep.subr.mxu0 0.0
        %526 = vmatpush1.msra.mxu0 0.0
        %527 = vmatprep.subr.mxu0 0.0
        %528 = vmatpush1.msra.mxu0 0.0
        %529 = vmatprep.subr.mxu0 0.0
        %530 = vmatpush1.msra.mxu0 0.0
        %531 = vmatprep.subr.mxu0 0.0
        %532 = vmatpush1.msra.mxu0 0.0
        %533 = vmatprep.subr.mxu0 0.0
        %534 = vmatpush1.msra.mxu0 0.0
        %535 = vmatprep.subr.mxu0 0.0
        %536 = vmatpush1.msra.mxu0 0.0
        %537 = vmatprep.subr.mxu0 0.0
        %538 = vmatpush1.msra.mxu0 0.0
        %539 = vmatprep.subr.mxu0 0.0
        %540 = vmatpush1.msra.mxu0 0.0
        %541 = vmatprep.subr.mxu0 0.0
        %542 = vmatpush1.msra.mxu0 0.0
        %543 = vmatprep.subr.mxu0 0.0
        %544 = vmatpush1.msra.mxu0 0.0
        %545 = vmatprep.subr.mxu0 0.0
        %546 = vmatpush1.msra.mxu0 0.0
        %547 = vmatprep.subr.mxu0 0.0
        %548 = vmatpush1.msra.mxu0 0.0
        %549 = vmatprep.subr.mxu0 0.0
        %550 = vmatpush1.msra.mxu0 0.0
        %551 = vmatprep.subr.mxu0 0.0
        %552 = vmatpush1.msra.mxu0 0.0
        %553 = vmatprep.subr.mxu0 0.0
        %554 = vmatpush1.msra.mxu0 0.0
        %555 = vmatprep.subr.mxu0 0.0
        %556 = vmatpush1.msra.mxu0 0.0
        %557 = vmatprep.subr.mxu0 0.0
        %558 = vmatpush1.msra.mxu0 0.0
        %559 = vmatprep.subr.mxu0 0.0
        %560 = vmatpush1.msra.mxu0 0.0
        %561 = vmatprep.subr.mxu0 0.0
        %562 = vmatpush1.msra.mxu0 0.0
        %563 = vmatprep.subr.mxu0 0.0
        %564 = vmatpush1.msra.mxu0 0.0
        %565 = vmatprep.subr.mxu0 0.0
        %566 = vmatpush1.msra.mxu0 0.0
        %567 = vmatprep.subr.mxu0 0.0
        %568 = vmatpush1.msra.mxu0 0.0
        %569 = vmatprep.subr.mxu0 0.0
        %570 = vmatpush1.msra.mxu0 0.0
        %571 = vmatprep.subr.mxu0 0.0
        %572 = vmatpush1.msra.mxu0 0.0
        %573 = vmatprep.subr.mxu0 0.0
        %574 = vmatpush1.msra.mxu0 0.0
        %575 = vmatprep.mubr.f32.mxu0 0.0
        %576 = vmatmul.mubr.f32.gmra.mrb[0].mxu0 %v509
        %v577 = vpop.f32.mrb[0].mxu0
        %v578 = vadd.f32 0.0, %v577
        %v579 = vpop.f32.mrb[0].mxu0
        %580 = vdwg.mxu0
        %v582 = vsel %vm507, %v499, 0
        %584 = vmatprep.subr.mxu0 0.0
        %585 = vmatpush1.msra.mxu0 %v503
        %586 = vmatprep.subr.mxu0 0.0
        %587 = vmatpush1.msra.mxu0 %v504
        %588 = vmatprep.subr.mxu0 0.0
        %589 = vmatpush1.msra.mxu0 %v505
        %590 = vmatprep.subr.mxu0 0.0
        %591 = vmatpush1.msra.mxu0 %v506
        %592 = vmatprep.subr.mxu0 0.0
        %593 = vmatpush1.msra.mxu0 0.0
        %594 = vmatprep.subr.mxu0 0.0
        %595 = vmatpush1.msra.mxu0 0.0
        %596 = vmatprep.subr.mxu0 0.0
        %597 = vmatpush1.msra.mxu0 0.0
        %598 = vmatprep.subr.mxu0 0.0
        %599 = vmatpush1.msra.mxu0 0.0
        %600 = vmatprep.subr.mxu0 0.0
        %601 = vmatpush1.msra.mxu0 0.0
        %602 = vmatprep.subr.mxu0 0.0
        %603 = vmatpush1.msra.mxu0 0.0
        %604 = vmatprep.subr.mxu0 0.0
        %605 = vmatpush1.msra.mxu0 0.0
        %606 = vmatprep.subr.mxu0 0.0
        %607 = vmatpush1.msra.mxu0 0.0
        %608 = vmatprep.subr.mxu0 0.0
        %609 = vmatpush1.msra.mxu0 0.0
        %610 = vmatprep.subr.mxu0 0.0
        %611 = vmatpush1.msra.mxu0 0.0
        %612 = vmatprep.subr.mxu0 0.0
        %613 = vmatpush1.msra.mxu0 0.0
        %614 = vmatprep.subr.mxu0 0.0
        %615 = vmatpush1.msra.mxu0 0.0
        %616 = vmatprep.subr.mxu0 0.0
        %617 = vmatpush1.msra.mxu0 0.0
        %618 = vmatprep.subr.mxu0 0.0
        %619 = vmatpush1.msra.mxu0 0.0
        %620 = vmatprep.subr.mxu0 0.0
        %621 = vmatpush1.msra.mxu0 0.0
        %622 = vmatprep.subr.mxu0 0.0
        %623 = vmatpush1.msra.mxu0 0.0
        %624 = vmatprep.subr.mxu0 0.0
        %625 = vmatpush1.msra.mxu0 0.0
        %626 = vmatprep.subr.mxu0 0.0
        %627 = vmatpush1.msra.mxu0 0.0
        %628 = vmatprep.subr.mxu0 0.0
        %629 = vmatpush1.msra.mxu0 0.0
        %630 = vmatprep.subr.mxu0 0.0
        %631 = vmatpush1.msra.mxu0 0.0
        %632 = vmatprep.subr.mxu0 0.0
        %633 = vmatpush1.msra.mxu0 0.0
        %634 = vmatprep.subr.mxu0 0.0
        %635 = vmatpush1.msra.mxu0 0.0
        %636 = vmatprep.subr.mxu0 0.0
        %637 = vmatpush1.msra.mxu0 0.0
        %638 = vmatprep.subr.mxu0 0.0
        %639 = vmatpush1.msra.mxu0 0.0
        %640 = vmatprep.subr.mxu0 0.0
        %641 = vmatpush1.msra.mxu0 0.0
        %642 = vmatprep.subr.mxu0 0.0
        %643 = vmatpush1.msra.mxu0 0.0
        %644 = vmatprep.subr.mxu0 0.0
        %645 = vmatpush1.msra.mxu0 0.0
        %646 = vmatprep.subr.mxu0 0.0
        %647 = vmatpush1.msra.mxu0 0.0
        %648 = vmatprep.mubr.f32.mxu0 0.0
        %649 = vmatmul.mubr.f32.gmra.mrb[0].mxu0 %v582
        %v650 = vpop.f32.mrb[0].mxu0
        %v651 = vadd.f32 0.0, %v650
        %v652 = vpop.f32.mrb[0].mxu0
        %653 = vdwg.mxu0
        %v654 = vmul.f32 %v498, %v501
        %v655 = vmul.f32 %v578, %v502
        %v656 = vmul.f32 %v499, %v501
        %v657 = vmul.f32 %v651, %v502
        %v658 = vlaneseq
        %v659 = vshrl.u32 %v658, 7
        %v660 = vlaneseq
        %v661 = vand.u32 %v660, 127
        %vm662 = vcmp.gt.s32.totalorder %v661, %v659
        %v663 = vld [vmem:[%s3] sm:$0x1]
        %v664 = vld [vmem:[#allocation9] sm:$0x1]
        %v665 = vlaneseq
        %v666 = vshrl.u32 %v665, 7
        %v667 = vsub.s32 0, %v666
        %v668 = vrot.slane %v663, %v667
        %v669 = vmul.f32 %v654, %v668
        %v670 = vlaneseq
        %v671 = vshrl.u32 %v670, 7
        %v672 = vsub.s32 0, %v671
        %v673 = vrot.slane %v664, %v672
        %v674 = vmul.f32 %v655, %v673
        %v675 = vadd.f32 %v669, %v674
        %v676 = vmul.f32 %v656, %v668
        %v677 = vmul.f32 %v657, %v673
        %v678 = vadd.f32 %v676, %v677
        %v680 = vsel %vm507, %v675, 0
        %v683 = vsel %vm507, %v678, 0
        %685 = vmatprep.subr.mxu0 0.0
        %686 = vmatpush1.xpose.msra.mxu0 %v683
        %687 = vmatprep.subr.mxu0 0.0
        %688 = vmatpush1.xpose.msra.mxu0 0.0
        %689 = vmatprep.subr.mxu0 0.0
        %690 = vmatpush1.xpose.msra.mxu0 0.0
        %691 = vmatprep.subr.mxu0 0.0
        %692 = vmatpush1.xpose.msra.mxu0 0.0
        %693 = vmatprep.subr.mxu0 0.0
        %694 = vmatpush1.xpose.msra.mxu0 0.0
        %695 = vmatprep.subr.mxu0 0.0
        %696 = vmatpush1.xpose.msra.mxu0 0.0
        %697 = vmatprep.subr.mxu0 0.0
        %698 = vmatpush1.xpose.msra.mxu0 0.0
        %699 = vmatprep.subr.mxu0 0.0
        %700 = vmatpush1.xpose.msra.mxu0 0.0
        %701 = vmatprep.subr.mxu0 0.0
        %702 = vmatpush1.xpose.msra.mxu0 0.0
        %703 = vmatprep.subr.mxu0 0.0
        %704 = vmatpush1.xpose.msra.mxu0 0.0
        %705 = vmatprep.subr.mxu0 0.0
        %706 = vmatpush1.xpose.msra.mxu0 0.0
        %707 = vmatprep.subr.mxu0 0.0
        %708 = vmatpush1.xpose.msra.mxu0 0.0
        %709 = vmatprep.subr.mxu0 0.0
        %710 = vmatpush1.xpose.msra.mxu0 0.0
        %711 = vmatprep.subr.mxu0 0.0
        %712 = vmatpush1.xpose.msra.mxu0 0.0
        %713 = vmatprep.subr.mxu0 0.0
        %714 = vmatpush1.xpose.msra.mxu0 0.0
        %715 = vmatprep.subr.mxu0 0.0
        %716 = vmatpush1.xpose.msra.mxu0 0.0
        %717 = vmatprep.subr.mxu0 0.0
        %718 = vmatpush1.xpose.msra.mxu0 0.0
        %719 = vmatprep.subr.mxu0 0.0
        %720 = vmatpush1.xpose.msra.mxu0 0.0
        %721 = vmatprep.subr.mxu0 0.0
        %722 = vmatpush1.xpose.msra.mxu0 0.0
        %723 = vmatprep.subr.mxu0 0.0
        %724 = vmatpush1.xpose.msra.mxu0 0.0
        %725 = vmatprep.subr.mxu0 0.0
        %726 = vmatpush1.xpose.msra.mxu0 0.0
        %727 = vmatprep.subr.mxu0 0.0
        %728 = vmatpush1.xpose.msra.mxu0 0.0
        %729 = vmatprep.subr.mxu0 0.0
        %730 = vmatpush1.xpose.msra.mxu0 0.0
        %731 = vmatprep.subr.mxu0 0.0
        %732 = vmatpush1.xpose.msra.mxu0 0.0
        %733 = vmatprep.subr.mxu0 0.0
        %734 = vmatpush1.xpose.msra.mxu0 0.0
        %735 = vmatprep.subr.mxu0 0.0
        %736 = vmatpush1.xpose.msra.mxu0 0.0
        %737 = vmatprep.subr.mxu0 0.0
        %738 = vmatpush1.xpose.msra.mxu0 0.0
        %739 = vmatprep.subr.mxu0 0.0
        %740 = vmatpush1.xpose.msra.mxu0 0.0
        %741 = vmatprep.subr.mxu0 0.0
        %742 = vmatpush1.xpose.msra.mxu0 0.0
        %743 = vmatprep.subr.mxu0 0.0
        %744 = vmatpush1.xpose.msra.mxu0 0.0
        %745 = vmatprep.subr.mxu0 0.0
        %746 = vmatpush1.xpose.msra.mxu0 0.0
        %747 = vmatprep.subr.mxu0 0.0
        %748 = vmatpush1.xpose.msra.mxu0 0.0
        %749 = vmatprep.mubr.f32.mxu0 0.0
        %750 = vmatmul.mubr.f32.gmra.mrb[0].mxu0 %v680
        %v751 = vpop.f32.mrb[0].mxu0
        %v752 = vadd.f32 0.0, %v751
        %v753 = vpop.f32.mrb[0].mxu0
        %754 = vdwg.mxu0
        %v755 = vsel %vm662, -1e+30, %v752
        %vm756 = vcmask 64512
        %v757 = vsel %vm756, %v755, -inf
        %758 = vmax.xlane.f32.xlu0 %v757
        %v759 = vpop.xlane.xlu0 %758
        %v760 = vsub.f32 %v755, %v759
        %v761 = vmul.f32 %v760, 1.442695
        %v762 = vpow.pop %v761
        %v763 = vsel %vm756, %v762, 0.0
        %764 = vadd.xlane.f32.xlu0 %v763
        %v765 = vpop.xlane.xlu0 %764
        %v766 = vrcp.pop %v765
        %v767 = vmul.f32 %v762, %v766
        %s768 = sld [smem:[#allocation14]]
        %v769 = vstv %s768
        %v770 = vmul.f32 %v769, %v767
        %v771 = vadd.f32 %v770, 0.0
        %v772 = vld [vmem:[%s3 + $0x1] sm:$0x1]
        %v773 = vld [vmem:[#allocation9 + $0x1] sm:$0x1]
        %v774 = vlaneseq
        %v775 = vshrl.u32 %v774, 7
        %v776 = vsub.s32 0, %v775
        %v777 = vrot.slane %v772, %v776
        %v778 = vmul.f32 %v654, %v777
        %v779 = vlaneseq
        %v780 = vshrl.u32 %v779, 7
        %v781 = vsub.s32 0, %v780
        %v782 = vrot.slane %v773, %v781
        %v783 = vmul.f32 %v655, %v782
        %v784 = vadd.f32 %v778, %v783
        %v785 = vmul.f32 %v656, %v777
        %v786 = vmul.f32 %v657, %v782
        %v787 = vadd.f32 %v785, %v786
        %v789 = vsel %vm507, %v784, 0
        %v792 = vsel %vm507, %v787, 0
        %794 = vmatprep.subr.mxu0 0.0
        %795 = vmatpush1.xpose.msra.mxu0 %v792
        %796 = vmatprep.subr.mxu0 0.0
        %797 = vmatpush1.xpose.msra.mxu0 0.0
        %798 = vmatprep.subr.mxu0 0.0
        %799 = vmatpush1.xpose.msra.mxu0 0.0
        %800 = vmatprep.subr.mxu0 0.0
        %801 = vmatpush1.xpose.msra.mxu0 0.0
        %802 = vmatprep.subr.mxu0 0.0
        %803 = vmatpush1.xpose.msra.mxu0 0.0
        %804 = vmatprep.subr.mxu0 0.0
        %805 = vmatpush1.xpose.msra.mxu0 0.0
        %806 = vmatprep.subr.mxu0 0.0
        %807 = vmatpush1.xpose.msra.mxu0 0.0
        %808 = vmatprep.subr.mxu0 0.0
        %809 = vmatpush1.xpose.msra.mxu0 0.0
        %810 = vmatprep.subr.mxu0 0.0
        %811 = vmatpush1.xpose.msra.mxu0 0.0
        %812 = vmatprep.subr.mxu0 0.0
        %813 = vmatpush1.xpose.msra.mxu0 0.0
        %814 = vmatprep.subr.mxu0 0.0
        %815 = vmatpush1.xpose.msra.mxu0 0.0
        %816 = vmatprep.subr.mxu0 0.0
        %817 = vmatpush1.xpose.msra.mxu0 0.0
        %818 = vmatprep.subr.mxu0 0.0
        %819 = vmatpush1.xpose.msra.mxu0 0.0
        %820 = vmatprep.subr.mxu0 0.0
        %821 = vmatpush1.xpose.msra.mxu0 0.0
        %822 = vmatprep.subr.mxu0 0.0
        %823 = vmatpush1.xpose.msra.mxu0 0.0
        %824 = vmatprep.subr.mxu0 0.0
        %825 = vmatpush1.xpose.msra.mxu0 0.0
        %826 = vmatprep.subr.mxu0 0.0
        %827 = vmatpush1.xpose.msra.mxu0 0.0
        %828 = vmatprep.subr.mxu0 0.0
        %829 = vmatpush1.xpose.msra.mxu0 0.0
        %830 = vmatprep.subr.mxu0 0.0
        %831 = vmatpush1.xpose.msra.mxu0 0.0
        %832 = vmatprep.subr.mxu0 0.0
        %833 = vmatpush1.xpose.msra.mxu0 0.0
        %834 = vmatprep.subr.mxu0 0.0
        %835 = vmatpush1.xpose.msra.mxu0 0.0
        %836 = vmatprep.subr.mxu0 0.0
        %837 = vmatpush1.xpose.msra.mxu0 0.0
        %838 = vmatprep.subr.mxu0 0.0
        %839 = vmatpush1.xpose.msra.mxu0 0.0
        %840 = vmatprep.subr.mxu0 0.0
        %841 = vmatpush1.xpose.msra.mxu0 0.0
        %842 = vmatprep.subr.mxu0 0.0
        %843 = vmatpush1.xpose.msra.mxu0 0.0
        %844 = vmatprep.subr.mxu0 0.0
        %845 = vmatpush1.xpose.msra.mxu0 0.0
        %846 = vmatprep.subr.mxu0 0.0
        %847 = vmatpush1.xpose.msra.mxu0 0.0
        %848 = vmatprep.subr.mxu0 0.0
        %849 = vmatpush1.xpose.msra.mxu0 0.0
        %850 = vmatprep.subr.mxu0 0.0
        %851 = vmatpush1.xpose.msra.mxu0 0.0
        %852 = vmatprep.subr.mxu0 0.0
        %853 = vmatpush1.xpose.msra.mxu0 0.0
        %854 = vmatprep.subr.mxu0 0.0
        %855 = vmatpush1.xpose.msra.mxu0 0.0
        %856 = vmatprep.subr.mxu0 0.0
        %857 = vmatpush1.xpose.msra.mxu0 0.0
        %858 = vmatprep.mubr.f32.mxu0 0.0
        %859 = vmatmul.mubr.f32.gmra.mrb[0].mxu0 %v789
        %v860 = vpop.f32.mrb[0].mxu0
        %v861 = vadd.f32 0.0, %v860
        %v862 = vpop.f32.mrb[0].mxu0
        %863 = vdwg.mxu0
        %v864 = vsel %vm662, -1e+30, %v861
        %v865 = vsel %vm756, %v864, -inf
        %866 = vmax.xlane.f32.xlu0 %v865
        %v867 = vpop.xlane.xlu0 %866
        %v868 = vsub.f32 %v864, %v867
        %v869 = vmul.f32 %v868, 1.442695
        %v870 = vpow.pop %v869
        %v871 = vsel %vm756, %v870, 0.0
        %872 = vadd.xlane.f32.xlu0 %v871
        %v873 = vpop.xlane.xlu0 %872
        %v874 = vrcp.pop %v873
        %v875 = vmul.f32 %v870, %v874
        %s876 = sld [smem:[#allocation14 + $0x1]]
        %v877 = vstv %s876
        %v878 = vmul.f32 %v877, %v875
        %v879 = vadd.f32 %v771, %v878
        %v880 = vld [vmem:[%s3 + $0x2] sm:$0x1]
        %v881 = vld [vmem:[#allocation9 + $0x2] sm:$0x1]
        %v882 = vlaneseq
        %v883 = vshrl.u32 %v882, 7
        %v884 = vsub.s32 0, %v883
        %v885 = vrot.slane %v880, %v884
        %v886 = vmul.f32 %v654, %v885
        %v887 = vlaneseq
        %v888 = vshrl.u32 %v887, 7
        %v889 = vsub.s32 0, %v888
        %v890 = vrot.slane %v881, %v889
        %v891 = vmul.f32 %v655, %v890
        %v892 = vadd.f32 %v886, %v891
        %v893 = vmul.f32 %v656, %v885
        %v894 = vmul.f32 %v657, %v890
        %v895 = vadd.f32 %v893, %v894
        %v897 = vsel %vm507, %v892, 0
        %v900 = vsel %vm507, %v895, 0
        %902 = vmatprep.subr.mxu0 0.0
        %903 = vmatpush1.xpose.msra.mxu0 %v900
        %904 = vmatprep.subr.mxu0 0.0
        %905 = vmatpush1.xpose.msra.mxu0 0.0
        %906 = vmatprep.subr.mxu0 0.0
        %907 = vmatpush1.xpose.msra.mxu0 0.0
        %908 = vmatprep.subr.mxu0 0.0
        %909 = vmatpush1.xpose.msra.mxu0 0.0
        %910 = vmatprep.subr.mxu0 0.0
        %911 = vmatpush1.xpose.msra.mxu0 0.0
        %912 = vmatprep.subr.mxu0 0.0
        %913 = vmatpush1.xpose.msra.mxu0 0.0
        %914 = vmatprep.subr.mxu0 0.0
        %915 = vmatpush1.xpose.msra.mxu0 0.0
        %916 = vmatprep.subr.mxu0 0.0
        %917 = vmatpush1.xpose.msra.mxu0 0.0
        %918 = vmatprep.subr.mxu0 0.0
        %919 = vmatpush1.xpose.msra.mxu0 0.0
        %920 = vmatprep.subr.mxu0 0.0
        %921 = vmatpush1.xpose.msra.mxu0 0.0
        %922 = vmatprep.subr.mxu0 0.0
        %923 = vmatpush1.xpose.msra.mxu0 0.0
        %924 = vmatprep.subr.mxu0 0.0
        %925 = vmatpush1.xpose.msra.mxu0 0.0
        %926 = vmatprep.subr.mxu0 0.0
        %927 = vmatpush1.xpose.msra.mxu0 0.0
        %928 = vmatprep.subr.mxu0 0.0
        %929 = vmatpush1.xpose.msra.mxu0 0.0
        %930 = vmatprep.subr.mxu0 0.0
        %931 = vmatpush1.xpose.msra.mxu0 0.0
        %932 = vmatprep.subr.mxu0 0.0
        %933 = vmatpush1.xpose.msra.mxu0 0.0
        %934 = vmatprep.subr.mxu0 0.0
        %935 = vmatpush1.xpose.msra.mxu0 0.0
        %936 = vmatprep.subr.mxu0 0.0
        %937 = vmatpush1.xpose.msra.mxu0 0.0
        %938 = vmatprep.subr.mxu0 0.0
        %939 = vmatpush1.xpose.msra.mxu0 0.0
        %940 = vmatprep.subr.mxu0 0.0
        %941 = vmatpush1.xpose.msra.mxu0 0.0
        %942 = vmatprep.subr.mxu0 0.0
        %943 = vmatpush1.xpose.msra.mxu0 0.0
        %944 = vmatprep.subr.mxu0 0.0
        %945 = vmatpush1.xpose.msra.mxu0 0.0
        %946 = vmatprep.subr.mxu0 0.0
        %947 = vmatpush1.xpose.msra.mxu0 0.0
        %948 = vmatprep.subr.mxu0 0.0
        %949 = vmatpush1.xpose.msra.mxu0 0.0
        %950 = vmatprep.subr.mxu0 0.0
        %951 = vmatpush1.xpose.msra.mxu0 0.0
        %952 = vmatprep.subr.mxu0 0.0
        %953 = vmatpush1.xpose.msra.mxu0 0.0
        %954 = vmatprep.subr.mxu0 0.0
        %955 = vmatpush1.xpose.msra.mxu0 0.0
        %956 = vmatprep.subr.mxu0 0.0
        %957 = vmatpush1.xpose.msra.mxu0 0.0
        %958 = vmatprep.subr.mxu0 0.0
        %959 = vmatpush1.xpose.msra.mxu0 0.0
        %960 = vmatprep.subr.mxu0 0.0
        %961 = vmatpush1.xpose.msra.mxu0 0.0
        %962 = vmatprep.subr.mxu0 0.0
        %963 = vmatpush1.xpose.msra.mxu0 0.0
        %964 = vmatprep.subr.mxu0 0.0
        %965 = vmatpush1.xpose.msra.mxu0 0.0
        %966 = vmatprep.mubr.f32.mxu0 0.0
        %967 = vmatmul.mubr.f32.gmra.mrb[0].mxu0 %v897
        %v968 = vpop.f32.mrb[0].mxu0
        %v969 = vadd.f32 0.0, %v968
        %v970 = vpop.f32.mrb[0].mxu0
        %971 = vdwg.mxu0
        %v972 = vsel %vm662, -1e+30, %v969
        %v973 = vsel %vm756, %v972, -inf
        %974 = vmax.xlane.f32.xlu0 %v973
        %v975 = vpop.xlane.xlu0 %974
        %v976 = vsub.f32 %v972, %v975
        %v977 = vmul.f32 %v976, 1.442695
        %v978 = vpow.pop %v977
        %v979 = vsel %vm756, %v978, 0.0
        %980 = vadd.xlane.f32.xlu0 %v979
        %v981 = vpop.xlane.xlu0 %980
        %v982 = vrcp.pop %v981
        %v983 = vmul.f32 %v978, %v982
        %s984 = sld [smem:[#allocation14 + $0x2]]
        %v985 = vstv %s984
        %v986 = vmul.f32 %v985, %v983
        %v987 = vadd.f32 %v879, %v986
        %v988 = vld [vmem:[%s3 + $0x3] sm:$0x1]
        %v989 = vld [vmem:[#allocation9 + $0x3] sm:$0x1]
        %v990 = vlaneseq
        %v991 = vshrl.u32 %v990, 7
        %v992 = vsub.s32 0, %v991
        %v993 = vrot.slane %v988, %v992
        %v994 = vmul.f32 %v654, %v993
        %v995 = vlaneseq
        %v996 = vshrl.u32 %v995, 7
        %v997 = vsub.s32 0, %v996
        %v998 = vrot.slane %v989, %v997
        %v999 = vmul.f32 %v655, %v998
        %v1000 = vadd.f32 %v994, %v999
        %v1001 = vmul.f32 %v656, %v993
        %v1002 = vmul.f32 %v657, %v998
        %v1003 = vadd.f32 %v1001, %v1002
        %v1005 = vsel %vm507, %v1000, 0
        %v1008 = vsel %vm507, %v1003, 0
        %1010 = vmatprep.subr.mxu0 0.0
        %1011 = vmatpush1.xpose.msra.mxu0 %v1008
        %1012 = vmatprep.subr.mxu0 0.0
        %1013 = vmatpush1.xpose.msra.mxu0 0.0
        %1014 = vmatprep.subr.mxu0 0.0
        %1015 = vmatpush1.xpose.msra.mxu0 0.0
        %1016 = vmatprep.subr.mxu0 0.0
        %1017 = vmatpush1.xpose.msra.mxu0 0.0
        %1018 = vmatprep.subr.mxu0 0.0
        %1019 = vmatpush1.xpose.msra.mxu0 0.0
        %1020 = vmatprep.subr.mxu0 0.0
        %1021 = vmatpush1.xpose.msra.mxu0 0.0
        %1022 = vmatprep.subr.mxu0 0.0
        %1023 = vmatpush1.xpose.msra.mxu0 0.0
        %1024 = vmatprep.subr.mxu0 0.0
        %1025 = vmatpush1.xpose.msra.mxu0 0.0
        %1026 = vmatprep.subr.mxu0 0.0
        %1027 = vmatpush1.xpose.msra.mxu0 0.0
        %1028 = vmatprep.subr.mxu0 0.0
        %1029 = vmatpush1.xpose.msra.mxu0 0.0
        %1030 = vmatprep.subr.mxu0 0.0
        %1031 = vmatpush1.xpose.msra.mxu0 0.0
        %1032 = vmatprep.subr.mxu0 0.0
        %1033 = vmatpush1.xpose.msra.mxu0 0.0
        %1034 = vmatprep.subr.mxu0 0.0
        %1035 = vmatpush1.xpose.msra.mxu0 0.0
        %1036 = vmatprep.subr.mxu0 0.0
        %1037 = vmatpush1.xpose.msra.mxu0 0.0
        %1038 = vmatprep.subr.mxu0 0.0
        %1039 = vmatpush1.xpose.msra.mxu0 0.0
        %1040 = vmatprep.subr.mxu0 0.0
        %1041 = vmatpush1.xpose.msra.mxu0 0.0
        %1042 = vmatprep.subr.mxu0 0.0
        %1043 = vmatpush1.xpose.msra.mxu0 0.0
        %1044 = vmatprep.subr.mxu0 0.0
        %1045 = vmatpush1.xpose.msra.mxu0 0.0
        %1046 = vmatprep.subr.mxu0 0.0
        %1047 = vmatpush1.xpose.msra.mxu0 0.0
        %1048 = vmatprep.subr.mxu0 0.0
        %1049 = vmatpush1.xpose.msra.mxu0 0.0
        %1050 = vmatprep.subr.mxu0 0.0
        %1051 = vmatpush1.xpose.msra.mxu0 0.0
        %1052 = vmatprep.subr.mxu0 0.0
        %1053 = vmatpush1.xpose.msra.mxu0 0.0
        %1054 = vmatprep.subr.mxu0 0.0
        %1055 = vmatpush1.xpose.msra.mxu0 0.0
        %1056 = vmatprep.subr.mxu0 0.0
        %1057 = vmatpush1.xpose.msra.mxu0 0.0
        %1058 = vmatprep.subr.mxu0 0.0
        %1059 = vmatpush1.xpose.msra.mxu0 0.0
        %1060 = vmatprep.subr.mxu0 0.0
        %1061 = vmatpush1.xpose.msra.mxu0 0.0
        %1062 = vmatprep.subr.mxu0 0.0
        %1063 = vmatpush1.xpose.msra.mxu0 0.0
        %1064 = vmatprep.subr.mxu0 0.0
        %1065 = vmatpush1.xpose.msra.mxu0 0.0
        %1066 = vmatprep.subr.mxu0 0.0
        %1067 = vmatpush1.xpose.msra.mxu0 0.0
        %1068 = vmatprep.subr.mxu0 0.0
        %1069 = vmatpush1.xpose.msra.mxu0 0.0
        %1070 = vmatprep.subr.mxu0 0.0
        %1071 = vmatpush1.xpose.msra.mxu0 0.0
        %1072 = vmatprep.subr.mxu0 0.0
        %1073 = vmatpush1.xpose.msra.mxu0 0.0
        %1074 = vmatprep.mubr.f32.mxu0 0.0
        %1075 = vmatmul.mubr.f32.gmra.mrb[0].mxu0 %v1005
        %v1076 = vpop.f32.mrb[0].mxu0
        %v1077 = vadd.f32 0.0, %v1076
        %v1078 = vpop.f32.mrb[0].mxu0
        %1079 = vdwg.mxu0
        %v1080 = vsel %vm662, -1e+30, %v1077
        %v1081 = vsel %vm756, %v1080, -inf
        %1082 = vmax.xlane.f32.xlu0 %v1081
        %v1083 = vpop.xlane.xlu0 %1082
        %v1084 = vsub.f32 %v1080, %v1083
        %v1085 = vmul.f32 %v1084, 1.442695
        %v1086 = vpow.pop %v1085
        %v1087 = vsel %vm756, %v1086, 0.0
        %1088 = vadd.xlane.f32.xlu0 %v1087
        %v1089 = vpop.xlane.xlu0 %1088
        %v1090 = vrcp.pop %v1089
        %v1091 = vmul.f32 %v1086, %v1090
        %s1092 = sld [smem:[#allocation14 + $0x3]]
        %v1093 = vstv %s1092
        %v1094 = vmul.f32 %v1093, %v1091
        %v1095 = vadd.f32 %v987, %v1094
        %vm1096 = vcmp.eq.s32.totalorder %v659, %v661
        %v1097 = vsel %vm1096, 0.0, %v1095
        %1098 = vxpose.xlu0.b32.start [1/16] %v1097, 128
        %1099 = vxpose.xlu0.b32.cont [2/16] 0.0, 128
        %1100 = vxpose.xlu0.b32.cont [3/16] 0.0, 128
        %1101 = vxpose.xlu0.b32.cont [4/16] 0.0, 128
        %1102 = vxpose.xlu0.b32.cont [5/16] 0.0, 128
        %1103 = vxpose.xlu0.b32.cont [6/16] 0.0, 128
        %1104 = vxpose.xlu0.b32.cont [7/16] 0.0, 128
        %1105 = vxpose.xlu0.b32.cont [8/16] 0.0, 128
        %1106 = vxpose.xlu0.b32.cont [9/16] 0.0, 128
        %1107 = vxpose.xlu0.b32.cont [10/16] 0.0, 128
        %1108 = vxpose.xlu0.b32.cont [11/16] 0.0, 128
        %1109 = vxpose.xlu0.b32.cont [12/16] 0.0, 128
        %1110 = vxpose.xlu0.b32.cont [13/16] 0.0, 128
        %1111 = vxpose.xlu0.b32.cont [14/16] 0.0, 128
        %1112 = vxpose.xlu0.b32.cont [15/16] 0.0, 128
        %1113 = vxpose.xlu0.b32.end [16/16] 0.0, 128
        %v1114 = vpop.trf.xlu0
        %v1115 = vpop.trf.xlu0
        %v1116 = vpop.trf.xlu0
        %v1117 = vpop.trf.xlu0
        %v1118 = vpop.trf.xlu0
        %v1119 = vpop.trf.xlu0
        %v1120 = vpop.trf.xlu0
        %v1121 = vpop.trf.xlu0
        %v1122 = vpop.trf.xlu0
        %v1123 = vpop.trf.xlu0
        %v1124 = vpop.trf.xlu0
        %v1125 = vpop.trf.xlu0
        %v1126 = vpop.trf.xlu0
        %v1127 = vpop.trf.xlu0
        %v1128 = vpop.trf.xlu0
        %v1129 = vpop.trf.xlu0
        %v1131 = vsel %vm756, %v1114, 0
        %1133 = vmatprep.subr.mxu0 0.0
        %1134 = vmatpush1.msra.mxu0 %v500
        %1135 = vmatprep.subr.mxu0 0.0
        %1136 = vmatpush1.msra.mxu0 0.0
        %1137 = vmatprep.subr.mxu0 0.0
        %1138 = vmatpush1.msra.mxu0 0.0
        %1139 = vmatprep.subr.mxu0 0.0
        %1140 = vmatpush1.msra.mxu0 0.0
        %1141 = vmatprep.subr.mxu0 0.0
        %1142 = vmatpush1.msra.mxu0 0.0
        %1143 = vmatprep.subr.mxu0 0.0
        %1144 = vmatpush1.msra.mxu0 0.0
        %1145 = vmatprep.subr.mxu0 0.0
        %1146 = vmatpush1.msra.mxu0 0.0
        %1147 = vmatprep.subr.mxu0 0.0
        %1148 = vmatpush1.msra.mxu0 0.0
        %1149 = vmatprep.subr.mxu0 0.0
        %1150 = vmatpush1.msra.mxu0 0.0
        %1151 = vmatprep.subr.mxu0 0.0
        %1152 = vmatpush1.msra.mxu0 0.0
        %1153 = vmatprep.subr.mxu0 0.0
        %1154 = vmatpush1.msra.mxu0 0.0
        %1155 = vmatprep.subr.mxu0 0.0
        %1156 = vmatpush1.msra.mxu0 0.0
        %1157 = vmatprep.subr.mxu0 0.0
        %1158 = vmatpush1.msra.mxu0 0.0
        %1159 = vmatprep.subr.mxu0 0.0
        %1160 = vmatpush1.msra.mxu0 0.0
        %1161 = vmatprep.subr.mxu0 0.0
        %1162 = vmatpush1.msra.mxu0 0.0
        %1163 = vmatprep.subr.mxu0 0.0
        %1164 = vmatpush1.msra.mxu0 0.0
        %1165 = vmatprep.subr.mxu0 0.0
        %1166 = vmatpush1.msra.mxu0 0.0
        %1167 = vmatprep.subr.mxu0 0.0
        %1168 = vmatpush1.msra.mxu0 0.0
        %1169 = vmatprep.subr.mxu0 0.0
        %1170 = vmatpush1.msra.mxu0 0.0
        %1171 = vmatprep.subr.mxu0 0.0
        %1172 = vmatpush1.msra.mxu0 0.0
        %1173 = vmatprep.subr.mxu0 0.0
        %1174 = vmatpush1.msra.mxu0 0.0
        %1175 = vmatprep.subr.mxu0 0.0
        %1176 = vmatpush1.msra.mxu0 0.0
        %1177 = vmatprep.subr.mxu0 0.0
        %1178 = vmatpush1.msra.mxu0 0.0
        %1179 = vmatprep.subr.mxu0 0.0
        %1180 = vmatpush1.msra.mxu0 0.0
        %1181 = vmatprep.subr.mxu0 0.0
        %1182 = vmatpush1.msra.mxu0 0.0
        %1183 = vmatprep.subr.mxu0 0.0
        %1184 = vmatpush1.msra.mxu0 0.0
        %1185 = vmatprep.subr.mxu0 0.0
        %1186 = vmatpush1.msra.mxu0 0.0
        %1187 = vmatprep.subr.mxu0 0.0
        %1188 = vmatpush1.msra.mxu0 0.0
        %1189 = vmatprep.subr.mxu0 0.0
        %1190 = vmatpush1.msra.mxu0 0.0
        %1191 = vmatprep.subr.mxu0 0.0
        %1192 = vmatpush1.msra.mxu0 0.0
        %1193 = vmatprep.subr.mxu0 0.0
        %1194 = vmatpush1.msra.mxu0 0.0
        %1195 = vmatprep.subr.mxu0 0.0
        %1196 = vmatpush1.msra.mxu0 0.0
        %1197 = vmatprep.mubr.f32.mxu0 0.0
        %1198 = vmatmul.mubr.f32.gmra.mrb[0].mxu0 %v1131
        %v1199 = vpop.f32.mrb[0].mxu0
        %v1200 = vadd.f32 0.0, %v1199
        %v1201 = vpop.f32.mrb[0].mxu0
        %1202 = vdwg.mxu0
        %v1203 = vld [vmem:[%s7] sm:$0xff]
        %1205 = vset.pattern.permute.xlu0 0
        %1206 = vperm.xlu0 %1205, %v1203
        %v1207 = vpop.permute.xlu0 %1206
        %v1209 = vmul.f32 %v1200, %v1207
        %1210 = vst.msk [vmem:[%s497] sm:$0xff] %vm507, %v1209
        %s1211 = sand.u32 %s266, 1
        %s1212 = scalar_lea.sflag [#allocation4], %s1211
        %s1213 = sand.u32 %s266, 1
        %s1214 = smul.addr %s1213, 8
        %s1215 = scalar_lea.vmem [#allocation15], %s1214
        // Predicated region
        $region89: #{tpu_custom_call.1} parent=59 // pred_check
          %p1216 = pneg %p276
        $region90: #{tpu_custom_call.1} parent=59 // pred_check_branch
          %1218 = sbr.rel (%p1216) target = $region92
        $region91: #{tpu_custom_call.1} parent=59 // pred_region
          %s1220 = ssub.s32 128, 128
          %1221 = vsyncadd %s1212, %s1220
          %s1222 = smul.addr %s33, 128
          %s1223 = scalar_lea.hbm %s10, %s1222
          %s1225 = sshll.u32 %s1215, 4
          %s1226 = int_to_ptr.vmem [resolvable:$true] %s1225
          %1228 = dma.vmem_to_hbm [thread:$0]  %s1226, 128, %s1223, %s1212
        $region92: #{tpu_custom_call.1} parent=59 // pred_fallthru
          _
      $region60: #{tpu_custom_call.1} parent=5 // pred_fallthru
        _
      %p1229 = scmp.le.s32.totalorder 2, %s28
      // Predicated region
      $region93: #{tpu_custom_call.1} parent=5 // pred_check
        %p1230 = pneg %p1229
      $region94: #{tpu_custom_call.1} parent=5 // pred_check_branch
        %1232 = sbr.rel (%p1230) target = $region96
      $region95: #{tpu_custom_call.1} parent=5 // pred_region
        %s1233 = ssub.s32 %s28, 2
        // Predicated region
        $region97: #{tpu_custom_call.1} parent=95 // pred_check
          %p1234 = pneg %p282
        $region98: #{tpu_custom_call.1} parent=95 // pred_check_branch
          %1236 = sbr.rel (%p1234) target = $region100
        $region99: #{tpu_custom_call.1} parent=95 // pred_region
          %s1237 = sand.u32 %s267, 1
          %s1238 = scalar_lea.sflag [#allocation4], %s1237
          %s1239 = sand.u32 %s267, 1
          %s1240 = smul.addr %s1239, 8
          %s1241 = scalar_lea.vmem [#allocation15], %s1240
          %1242 = dma.done %s1238, 128
        $region100: #{tpu_custom_call.1} parent=95 // pred_fallthru
          _
      $region96: #{tpu_custom_call.1} parent=5 // pred_fallthru
        _
    $region6: #{tpu_custom_call.1} parent=1 // loop_footer
      %s32 = sadd.s32 1, %s28
    $region7: #{tpu_custom_call.1} parent=1 // loop_footer_branch
      %27 = sbr.rel target = $region3
    $region8: #{tpu_custom_call.1} parent=1 // loop_exit
      _
    %1243 = vsyncpa [#allocation3], 1
    %s1244 = scalar_lea.sflag [#allocation3], 1
    %1245 = vsyncpa %s1244, 1
    %1246 = vsyncpa [#allocation7], 1
    %s1247 = scalar_lea.sflag [#allocation7], 1
    %1248 = vsyncpa %s1247, 1
    %1249 = vsyncpa [#allocation10], 1
    %1250 = vsyncpa [#allocation13], 1
    %1251 = vsyncpa [#allocation4], 1
    %s1252 = scalar_lea.sflag [#allocation4], 1
    %1253 = vsyncpa %s1252, 1
    %1254 = vsyncpa [#allocation5], 1
    %s1255 = scalar_lea.sflag [#allocation5], 1
    %1256 = vsyncpa %s1255, 1

</llo_original>
